<compile_context>
chip_gen: v7x
topology: tpu7x:2x2x1
jax: 0.10.0
libtpu: 0.0.40
codegen_flags: <defaults>
</compile_context>

<pallas_src>
import functools

import jax
import jax.numpy as jnp
from jax.experimental import pallas as pl
from jax.experimental.pallas import tpu as pltpu

RRELU_EVAL_SLOPE = (1.0 / 8.0 + 1.0 / 3.0) / 2.0  # torch RReLU eval negative slope
BN_EPS = 1e-5


# ----------------------------------------------------------------------------
# Pallas kernel: whole decoder forward for one tile of batch rows.
# ----------------------------------------------------------------------------
def decoder_kernel(x_ref,
                   w0_ref, c0_ref,
                   w1_ref, c1_ref,
                   wmu_ref, bmu_ref,
                   o_ref):
    # In-kernel bf16 cast of the activation tile (VPU filler, hidden under DMA).
    x = x_ref[...].astype(jnp.bfloat16)  # (bm, f_in)

    # hidden_0: Linear with BN folded into bf16 weights, f32 accumulate,
    # f32 epilogue (bias/shift + RReLU eval slope).
    h = jnp.dot(x, w0_ref[...], preferred_element_type=jnp.float32) + c0_ref[...]
    h = jnp.where(h >= 0, h, RRELU_EVAL_SLOPE * h)

    # hidden_1
    h = jnp.dot(h.astype(jnp.bfloat16), w1_ref[...],
                preferred_element_type=jnp.float32) + c1_ref[...]
    h = jnp.where(h >= 0, h, RRELU_EVAL_SLOPE * h)

    # mu head: (bm, h1) * (1, h1) broadcast multiply (VPU) + lane reduce (XLU)
    # -> (bm, 1).  b_mu arrives as an SMEM scalar.  No padded MXU pass.
    z = jnp.sum(h * wmu_ref[...], axis=-1, keepdims=True) + bmu_ref[0]
    o_ref[...] = jax.nn.sigmoid(z)


# ----------------------------------------------------------------------------
# Wrapper: sets up BlockSpecs / grid, tiles over the batch dimension.
# ----------------------------------------------------------------------------
@functools.partial(jax.jit, static_argnames=("bm",))
def decoder_forward(x, folded, *, bm=512):
    B, f_in = x.shape
    w0, c0, w1, c1, wmu, bmu = folded
    h0 = w0.shape[1]
    h1 = w1.shape[1]

    bm = min(bm, B)
    assert B % bm == 0, "batch must be a multiple of the batch tile"
    # TODO(synk): ragged trailing batch tiles would need wrapper-side padding.

    full = lambda i: (0, 0)  # weights / biases are resident across the grid

    out = pl.pallas_call(
        decoder_kernel,
        out_shape=jax.ShapeDtypeStruct((B, 1), jnp.float32),
        grid_spec=pl.GridSpec(
            grid=(B // bm,),
            in_specs=[
                pl.BlockSpec((bm, f_in), lambda i: (i, 0)),          # x tile (f32)
                pl.BlockSpec((f_in, h0), full),                      # W0' (bf16)
                pl.BlockSpec((1, h0), full),                         # c0  (f32)
                pl.BlockSpec((h0, h1), full),                        # W1' (bf16)
                pl.BlockSpec((1, h1), full),                         # c1  (f32)
                pl.BlockSpec((1, h1), full),                         # w_mu row (f32)
                pl.BlockSpec(memory_space=pltpu.MemorySpace.SMEM),   # b_mu scalar
            ],
            out_specs=pl.BlockSpec((bm, 1), lambda i: (i, 0)),
        ),
        compiler_params=pltpu.CompilerParams(
            dimension_semantics=("parallel",)),
    )(x, w0, c0, w1, c1, wmu, bmu)

    return out


# ----------------------------------------------------------------------------
# Parameter construction / folding (mirrors the module's __init__ shapes).
# ----------------------------------------------------------------------------
def make_params(key, f_in, hidden):
    h0, h1 = hidden
    ks = jax.random.split(key, 12)

    def lin(kw, kb, fin, fout):
        bound = 1.0 / jnp.sqrt(fin)
        w = jax.random.uniform(kw, (fin, fout), jnp.float32, -bound, bound)
        b = jax.random.uniform(kb, (1, fout), jnp.float32, -bound, bound)
        return w, b

    def bn(kg, kb, km, feat):
        gamma = 1.0 + 0.1 * jax.random.normal(kg, (1, feat), jnp.float32)
        beta = 0.1 * jax.random.normal(kb, (1, feat), jnp.float32)
        rmean = 0.05 * jax.random.normal(km, (1, feat), jnp.float32)
        rvar = jnp.ones((1, feat), jnp.float32)
        scale = gamma / jnp.sqrt(rvar + BN_EPS)
        shift = beta - rmean * scale
        return scale, shift

    w0, b0 = lin(ks[0], ks[1], f_in, h0)
    s0, t0 = bn(ks[2], ks[3], ks[4], h0)
    w1, b1 = lin(ks[5], ks[6], h0, h1)
    s1, t1 = bn(ks[7], ks[8], ks[9], h1)
    wmu, bmu = lin(ks[10], ks[11], h1, 1)
    return (w0, b0, s0, t0, w1, b1, s1, t1, wmu, bmu)


def fold_params(params):
    """Fold BN + bias into the weights; cast the MXU operands to bf16."""
    w0, b0, s0, t0, w1, b1, s1, t1, wmu, bmu = params

    w0f = (w0 * s0).astype(jnp.bfloat16)          # (f_in, h0)
    c0 = (b0 * s0 + t0).astype(jnp.float32)       # (1, h0)
    w1f = (w1 * s1).astype(jnp.bfloat16)          # (h0, h1)
    c1 = (b1 * s1 + t1).astype(jnp.float32)       # (1, h1)

    wmu_row = wmu.reshape(1, -1).astype(jnp.float32)   # (1, h1) f32 (VPU/XLU head)
    bmu_s = bmu.reshape(-1)[:1].astype(jnp.float32)    # (1,) SMEM scalar

    return (w0f, c0, w1f, c1, wmu_row, bmu_s)


# ----------------------------------------------------------------------------
# References for correctness checks.
# ----------------------------------------------------------------------------
def decoder_reference_folded(x, folded):
    """Pure-JAX mirror of the exact kernel arithmetic (bf16 MXU, f32 epilogue)."""
    w0, c0, w1, c1, wmu, bmu = folded
    xb = x.astype(jnp.bfloat16)
    h = jnp.dot(xb, w0, preferred_element_type=jnp.float32) + c0
    h = jnp.where(h >= 0, h, RRELU_EVAL_SLOPE * h)
    h = jnp.dot(h.astype(jnp.bfloat16), w1, preferred_element_type=jnp.float32) + c1
    h = jnp.where(h >= 0, h, RRELU_EVAL_SLOPE * h)
    z = jnp.sum(h * wmu, axis=-1, keepdims=True) + bmu[0]
    return jax.nn.sigmoid(z)


def decoder_reference_f32(x, params):
    """Full-f32 reference of the original module (inference semantics)."""
    w0, b0, s0, t0, w1, b1, s1, t1, wmu, bmu = params
    h = x @ w0 + b0
    h = h * s0 + t0
    h = jnp.where(h >= 0, h, RRELU_EVAL_SLOPE * h)
    h = h @ w1 + b1
    h = h * s1 + t1
    h = jnp.where(h >= 0, h, RRELU_EVAL_SLOPE * h)
    z = h @ wmu + bmu
    return jax.nn.sigmoid(z)


if __name__ == "__main__":
    # params dict of the PyTorch module:
    #   inputDim=8  -> self.inputDim = 9
    #   outputDim=8 -> latentDim = 8
    #   hiddenDim=[32, 64]
    # => first Linear in_features = latentDim + (inputDim_attr - 1) = 8 + 8 = 16
    input_dim = 8
    output_dim = 8
    hidden = (32, 64)
    f_in = output_dim + input_dim  # 16
    B = 1024                       # bm=512 -> grid=(2,): even, parallel (v7x: both TCs)

    key = jax.random.PRNGKey(0)
    kx, kp = jax.random.split(key)
    x = jax.random.normal(kx, (B, f_in), jnp.float32)
    params = make_params(kp, f_in, hidden)
    folded = fold_params(params)

    out = decoder_forward(x, folded, bm=512)
    out = jax.block_until_ready(out)
    assert out.shape == (B, 1)

    # Exact-arithmetic check (same bf16/f32 path as the kernel).
    ref = decoder_reference_folded(x, folded)
    assert jnp.allclose(out, ref, atol=1e-4, rtol=1e-4), "mismatch vs folded reference"

    # Semantics check against the original full-f32 module math (loose: bf16 MXU).
    ref32 = decoder_reference_f32(x, params)
    assert jnp.allclose(out, ref32, atol=3e-2, rtol=3e-2), "mismatch vs f32 reference"

    print("KERNEL_OK")
</pallas_src>

<mosaic_0001>
module attributes {stable_mosaic.version = 11 : i64} {
  func.func @decoder_kernel(%arg0: i32, %arg1: memref<512x16xf32, #tpu.memory_space<vmem>>, %arg2: memref<16x32xbf16, #tpu.memory_space<vmem>>, %arg3: memref<1x32xf32, #tpu.memory_space<vmem>>, %arg4: memref<32x64xbf16, #tpu.memory_space<vmem>>, %arg5: memref<1x64xf32, #tpu.memory_space<vmem>>, %arg6: memref<1x64xf32, #tpu.memory_space<vmem>>, %arg7: memref<1xf32, #tpu.memory_space<smem>>, %arg8: memref<512x1xf32, #tpu.memory_space<vmem>>) attributes {dimension_semantics = [#tpu.dimension_semantics<parallel>], iteration_bounds = array<i64: 2>, scalar_prefetch = 0 : i64, scratch_operands = 0 : i64, tpu.core_type = #tpu.core_type<tc>, window_params = [{transform_indices = @transform_0, window_bounds = array<i64: 512, 16>}, {pipeline_mode = #tpu.pipeline_mode<synchronous>, transform_indices = @transform_1, window_bounds = array<i64: 16, 32>}, {pipeline_mode = #tpu.pipeline_mode<synchronous>, transform_indices = @transform_2, window_bounds = array<i64: 1, 32>}, {pipeline_mode = #tpu.pipeline_mode<synchronous>, transform_indices = @transform_3, window_bounds = array<i64: 32, 64>}, {pipeline_mode = #tpu.pipeline_mode<synchronous>, transform_indices = @transform_4, window_bounds = array<i64: 1, 64>}, {pipeline_mode = #tpu.pipeline_mode<synchronous>, transform_indices = @transform_5, window_bounds = array<i64: 1, 64>}, {transform_indices = @transform_6, window_bounds = array<i64: 1>}, {transform_indices = @transform_7, window_bounds = array<i64: 512, 1>}]} {
    %c0 = arith.constant 0 : index
    %c0_0 = arith.constant 0 : index
    %0 = vector.load %arg1[%c0, %c0_0] : memref<512x16xf32, #tpu.memory_space<vmem>>, vector<512x16xf32>
    %1 = arith.truncf %0 : vector<512x16xf32> to vector<512x16xbf16>
    %c0_1 = arith.constant 0 : index
    %c0_2 = arith.constant 0 : index
    %2 = vector.load %arg2[%c0_1, %c0_2] : memref<16x32xbf16, #tpu.memory_space<vmem>>, vector<16x32xbf16>
    %cst = arith.constant dense<0.000000e+00> : vector<512x32xf32>
    %3 = tpu.matmul %1, %2, %cst {dimension_numbers = #tpu.dot_dimension_numbers<[1], [0], [0], [1], [0, 0, 1, 1], [], []>} : vector<512x16xbf16>, vector<16x32xbf16>, vector<512x32xf32> -> vector<512x32xf32>
    %c0_3 = arith.constant 0 : index
    %c0_4 = arith.constant 0 : index
    %4 = vector.load %arg3[%c0_3, %c0_4] : memref<1x32xf32, #tpu.memory_space<vmem>>, vector<1x32xf32>
    %5 = vector.broadcast %4 : vector<1x32xf32> to vector<512x32xf32>
    %6 = arith.addf %3, %5 : vector<512x32xf32>
    %cst_5 = arith.constant 0.000000e+00 : f32
    %7 = vector.broadcast %cst_5 : f32 to vector<512x32xf32>
    %8 = arith.cmpf oge, %6, %7 : vector<512x32xf32>
    %cst_6 = arith.constant 0.229166672 : f32
    %9 = vector.broadcast %cst_6 : f32 to vector<512x32xf32>
    %10 = arith.mulf %9, %6 : vector<512x32xf32>
    %11 = arith.select %8, %6, %10 : vector<512x32xi1>, vector<512x32xf32>
    %12 = arith.truncf %11 : vector<512x32xf32> to vector<512x32xbf16>
    %c0_7 = arith.constant 0 : index
    %c0_8 = arith.constant 0 : index
    %13 = vector.load %arg4[%c0_7, %c0_8] : memref<32x64xbf16, #tpu.memory_space<vmem>>, vector<32x64xbf16>
    %cst_9 = arith.constant dense<0.000000e+00> : vector<512x64xf32>
    %14 = tpu.matmul %12, %13, %cst_9 {dimension_numbers = #tpu.dot_dimension_numbers<[1], [0], [0], [1], [0, 0, 1, 1], [], []>} : vector<512x32xbf16>, vector<32x64xbf16>, vector<512x64xf32> -> vector<512x64xf32>
    %c0_10 = arith.constant 0 : index
    %c0_11 = arith.constant 0 : index
    %15 = vector.load %arg5[%c0_10, %c0_11] : memref<1x64xf32, #tpu.memory_space<vmem>>, vector<1x64xf32>
    %16 = vector.broadcast %15 : vector<1x64xf32> to vector<512x64xf32>
    %17 = arith.addf %14, %16 : vector<512x64xf32>
    %cst_12 = arith.constant 0.000000e+00 : f32
    %18 = vector.broadcast %cst_12 : f32 to vector<512x64xf32>
    %19 = arith.cmpf oge, %17, %18 : vector<512x64xf32>
    %cst_13 = arith.constant 0.229166672 : f32
    %20 = vector.broadcast %cst_13 : f32 to vector<512x64xf32>
    %21 = arith.mulf %20, %17 : vector<512x64xf32>
    %22 = arith.select %19, %17, %21 : vector<512x64xi1>, vector<512x64xf32>
    %c0_14 = arith.constant 0 : index
    %c0_15 = arith.constant 0 : index
    %23 = vector.load %arg6[%c0_14, %c0_15] : memref<1x64xf32, #tpu.memory_space<vmem>>, vector<1x64xf32>
    %24 = vector.broadcast %23 : vector<1x64xf32> to vector<512x64xf32>
    %25 = arith.mulf %22, %24 : vector<512x64xf32>
    %cst_16 = arith.constant dense<0.000000e+00> : vector<512xf32>
    %26 = vector.multi_reduction <add>, %25, %cst_16 [1] : vector<512x64xf32> to vector<512xf32>
    %27 = vector.shape_cast %26 : vector<512xf32> to vector<512x1xf32>
    %c0_17 = arith.constant 0 : index
    %28 = memref.load %arg7[%c0_17] : memref<1xf32, #tpu.memory_space<smem>>
    %29 = vector.broadcast %28 : f32 to vector<512x1xf32>
    %30 = arith.addf %27, %29 : vector<512x1xf32>
    %31 = arith.negf %30 : vector<512x1xf32>
    %32 = math.exp %31 : vector<512x1xf32>
    %cst_18 = arith.constant 1.000000e+00 : f32
    %33 = vector.broadcast %cst_18 : f32 to vector<512x1xf32>
    %34 = arith.addf %33, %32 : vector<512x1xf32>
    %35 = arith.divf %33, %34 : vector<512x1xf32>
    %c0_19 = arith.constant 0 : index
    %c0_20 = arith.constant 0 : index
    %36 = vector.load %arg8[%c0_19, %c0_20] : memref<512x1xf32, #tpu.memory_space<vmem>>, vector<512x1xf32>
    tpu.vector_store %arg8[%c0_19, %c0_20], %35 {strides = array<i32>} : memref<512x1xf32, #tpu.memory_space<vmem>>, vector<512x1xf32>,
    return
  }
  func.func @transform_0(%arg0: i32) -> (i32, i32) {
    %c0_i32 = arith.constant 0 : i32
    %c0_i32_0 = arith.constant 0 : i32
    return %arg0, %c0_i32 : i32, i32
  }
  func.func @transform_1(%arg0: i32) -> (i32, i32) {
    %c0_i32 = arith.constant 0 : i32
    %c0_i32_0 = arith.constant 0 : i32
    %c0_i32_1 = arith.constant 0 : i32
    return %c0_i32, %c0_i32_0 : i32, i32
  }
  func.func @transform_2(%arg0: i32) -> (i32, i32) {
    %c0_i32 = arith.constant 0 : i32
    %c0_i32_0 = arith.constant 0 : i32
    %c0_i32_1 = arith.constant 0 : i32
    return %c0_i32, %c0_i32_0 : i32, i32
  }
  func.func @transform_3(%arg0: i32) -> (i32, i32) {
    %c0_i32 = arith.constant 0 : i32
    %c0_i32_0 = arith.constant 0 : i32
    %c0_i32_1 = arith.constant 0 : i32
    return %c0_i32, %c0_i32_0 : i32, i32
  }
  func.func @transform_4(%arg0: i32) -> (i32, i32) {
    %c0_i32 = arith.constant 0 : i32
    %c0_i32_0 = arith.constant 0 : i32
    %c0_i32_1 = arith.constant 0 : i32
    return %c0_i32, %c0_i32_0 : i32, i32
  }
  func.func @transform_5(%arg0: i32) -> (i32, i32) {
    %c0_i32 = arith.constant 0 : i32
    %c0_i32_0 = arith.constant 0 : i32
    %c0_i32_1 = arith.constant 0 : i32
    return %c0_i32, %c0_i32_0 : i32, i32
  }
  func.func @transform_6(%arg0: i32) -> i32 {
    %c0_i32 = arith.constant 0 : i32
    %c0_i32_0 = arith.constant 0 : i32
    return %c0_i32 : i32
  }
  func.func @transform_7(%arg0: i32) -> (i32, i32) {
    %c0_i32 = arith.constant 0 : i32
    %c0_i32_0 = arith.constant 0 : i32
    return %arg0, %c0_i32 : i32, i32
  }
}

</mosaic_0001>

<llo_original>
// kernel: decoder_forward.1
$region0: #{decoder_forward.1}
  #allocation0 [shape = 'u32[]', space=smem, size = 0x4, offset = 0x4, fixed_abs, tag = 'smem constant byte address 0x4 - core index']
  #allocation1 [shape = 'u32[144,128]{1,0:T(1,128)}', space=vmem, size = 0x12000, scoped, tag = 'internal scratch']
  #allocation2 [shape = 'f32[1]{0:T(128)S(6)}', space=smem, size = 0x200, scoped, tag = 'scoped memory for decoder_forward.1']
  %s0 = inlined_call_operand.vmem [shape: f32[1024,16], index: 0, kind: input, shape index: {}]
  %s1 = inlined_call_operand.vmem [shape: bf16[16,32], index: 1, kind: input, shape index: {}]
  %s2 = inlined_call_operand.vmem [shape: f32[1,32], index: 2, kind: input, shape index: {}]
  %s3 = inlined_call_operand.vmem [shape: bf16[32,64], index: 3, kind: input, shape index: {}]
  %s4 = inlined_call_operand.vmem [shape: f32[1,64], index: 4, kind: input, shape index: {}]
  %s5 = inlined_call_operand.vmem [shape: f32[1,64], index: 5, kind: input, shape index: {}]
  %s6 = inlined_call_operand.<no memory space> [shape: f32[1], index: 6, kind: input, shape index: {}]
  %s7 = inlined_call_operand.vmem [shape: f32[1024,1], index: 7, kind: output, shape index: {}]
  %s8 = sld [smem:[#allocation0]]
  $region61: #{decoder_forward.1} parent=0
    _
  %s10 = ssub.s32 1, %s8
  %s11 = scalar_select 0, %s10, %s8
  %12 = sst [smem:[#allocation2]] %s6
  loop: start=0, step=1, limit=4
  $region2: #{decoder_forward.1} parent=0 // loop_pre_header
    _
  $region3: #{decoder_forward.1} parent=0 // loop_header
    %s14 = sphi 0, %s18
    %p15 = scmp.ge.s32.totalorder %s14, 4
    %s24 = sphi 0, %s26
    %s27 = sphi 0, %s24
    %s28 = sphi 0, %s27
    %s44 = sphi 0, %s28
    %s48 = sphi 0, %s48
    %s50 = sphi 0, %s48
    %s51 = sphi 0, %s50
    %s65 = sphi 0, %s51
    %s69 = sphi 0, %s69
    %s71 = sphi 0, %s69
    %s72 = sphi 0, %s71
    %s86 = sphi 0, %s72
    %s90 = sphi 0, %s90
    %s92 = sphi 0, %s90
    %s93 = sphi 0, %s92
    %s107 = sphi 0, %s93
    %s111 = sphi 0, %s111
    %s113 = sphi 0, %s111
    %s114 = sphi 0, %s113
    %s128 = sphi 0, %s114
    %s132 = sphi 0, %s132
    %s134 = sphi 0, %s132
    %s135 = sphi 0, %s134
    %s149 = sphi 0, %s135
    %s153 = sphi 0, %s153
    %s155 = sphi 0, %s153
    %s156 = sphi 0, %s155
    %s170 = sphi 0, %s156
    %s176 = sphi 0, %s178
    %s179 = sphi 0, %s176
    %s180 = sphi 0, %s179
    %s196 = sphi 0, %s180
  $region4: #{decoder_forward.1} parent=0 // loop_header_branch
    %17 = sbr.rel (%p15) target = $region8
  $region5: #{decoder_forward.1} parent=0 // loop_body
    %s19 = ssub.s32 %s14, 1
    %s20 = ssub.s32 %s14, 2
    %s21 = sadd.s32 %s14, 1
    %s22 = ssub.s32 %s14, %s21
    %p23 = scmp.eq.s32.totalorder %s22, 0
    %s25 = sadd.s32 %s24, 1
    %s26 = scalar_select %p23, %s24, %s25
    %p29 = pneg %p23
    %p30 = scmp.eq.s32.totalorder %s14, 1
    %p31 = por %p29, %p30
    %p32 = scmp.ne.s32.totalorder %s24, %s27
    %p33 = scmp.eq.s32.totalorder %s14, 0
    %p34 = por %p32, %p33
    %p35 = scmp.ne.s32.totalorder %s24, %s27
    %p36 = scmp.eq.s32.totalorder %s19, 1
    %p37 = por %p35, %p36
    %p38 = scmp.ne.s32.totalorder %s27, %s28
    %p39 = scmp.eq.s32.totalorder %s19, 0
    %p40 = por %p38, %p39
    %p41 = scmp.ne.s32.totalorder %s27, %s28
    %p42 = scmp.eq.s32.totalorder %s20, 1
    %p43 = por %p41, %p42
    %p45 = scmp.ne.s32.totalorder %s28, %s44
    %p46 = scmp.eq.s32.totalorder %s20, 0
    %p47 = por %p45, %p46
    %s49 = sadd.s32 %s48, 1
    %p52 = scmp.eq.s32.totalorder %s14, 1
    %p53 = scmp.ne.s32.totalorder %s48, %s50
    %p54 = scmp.eq.s32.totalorder %s14, 0
    %p55 = por %p53, %p54
    %p56 = scmp.ne.s32.totalorder %s48, %s50
    %p57 = scmp.eq.s32.totalorder %s19, 1
    %p58 = por %p56, %p57
    %p59 = scmp.ne.s32.totalorder %s50, %s51
    %p60 = scmp.eq.s32.totalorder %s19, 0
    %p61 = por %p59, %p60
    %p62 = scmp.ne.s32.totalorder %s50, %s51
    %p63 = scmp.eq.s32.totalorder %s20, 1
    %p64 = por %p62, %p63
    %p66 = scmp.ne.s32.totalorder %s51, %s65
    %p67 = scmp.eq.s32.totalorder %s20, 0
    %p68 = por %p66, %p67
    %s70 = sadd.s32 %s69, 1
    %p73 = scmp.eq.s32.totalorder %s14, 1
    %p74 = scmp.ne.s32.totalorder %s69, %s71
    %p75 = scmp.eq.s32.totalorder %s14, 0
    %p76 = por %p74, %p75
    %p77 = scmp.ne.s32.totalorder %s69, %s71
    %p78 = scmp.eq.s32.totalorder %s19, 1
    %p79 = por %p77, %p78
    %p80 = scmp.ne.s32.totalorder %s71, %s72
    %p81 = scmp.eq.s32.totalorder %s19, 0
    %p82 = por %p80, %p81
    %p83 = scmp.ne.s32.totalorder %s71, %s72
    %p84 = scmp.eq.s32.totalorder %s20, 1
    %p85 = por %p83, %p84
    %p87 = scmp.ne.s32.totalorder %s72, %s86
    %p88 = scmp.eq.s32.totalorder %s20, 0
    %p89 = por %p87, %p88
    %s91 = sadd.s32 %s90, 1
    %p94 = scmp.eq.s32.totalorder %s14, 1
    %p95 = scmp.ne.s32.totalorder %s90, %s92
    %p96 = scmp.eq.s32.totalorder %s14, 0
    %p97 = por %p95, %p96
    %p98 = scmp.ne.s32.totalorder %s90, %s92
    %p99 = scmp.eq.s32.totalorder %s19, 1
    %p100 = por %p98, %p99
    %p101 = scmp.ne.s32.totalorder %s92, %s93
    %p102 = scmp.eq.s32.totalorder %s19, 0
    %p103 = por %p101, %p102
    %p104 = scmp.ne.s32.totalorder %s92, %s93
    %p105 = scmp.eq.s32.totalorder %s20, 1
    %p106 = por %p104, %p105
    %p108 = scmp.ne.s32.totalorder %s93, %s107
    %p109 = scmp.eq.s32.totalorder %s20, 0
    %p110 = por %p108, %p109
    %s112 = sadd.s32 %s111, 1
    %p115 = scmp.eq.s32.totalorder %s14, 1
    %p116 = scmp.ne.s32.totalorder %s111, %s113
    %p117 = scmp.eq.s32.totalorder %s14, 0
    %p118 = por %p116, %p117
    %p119 = scmp.ne.s32.totalorder %s111, %s113
    %p120 = scmp.eq.s32.totalorder %s19, 1
    %p121 = por %p119, %p120
    %p122 = scmp.ne.s32.totalorder %s113, %s114
    %p123 = scmp.eq.s32.totalorder %s19, 0
    %p124 = por %p122, %p123
    %p125 = scmp.ne.s32.totalorder %s113, %s114
    %p126 = scmp.eq.s32.totalorder %s20, 1
    %p127 = por %p125, %p126
    %p129 = scmp.ne.s32.totalorder %s114, %s128
    %p130 = scmp.eq.s32.totalorder %s20, 0
    %p131 = por %p129, %p130
    %s133 = sadd.s32 %s132, 1
    %p136 = scmp.eq.s32.totalorder %s14, 1
    %p137 = scmp.ne.s32.totalorder %s132, %s134
    %p138 = scmp.eq.s32.totalorder %s14, 0
    %p139 = por %p137, %p138
    %p140 = scmp.ne.s32.totalorder %s132, %s134
    %p141 = scmp.eq.s32.totalorder %s19, 1
    %p142 = por %p140, %p141
    %p143 = scmp.ne.s32.totalorder %s134, %s135
    %p144 = scmp.eq.s32.totalorder %s19, 0
    %p145 = por %p143, %p144
    %p146 = scmp.ne.s32.totalorder %s134, %s135
    %p147 = scmp.eq.s32.totalorder %s20, 1
    %p148 = por %p146, %p147
    %p150 = scmp.ne.s32.totalorder %s135, %s149
    %p151 = scmp.eq.s32.totalorder %s20, 0
    %p152 = por %p150, %p151
    %s154 = sadd.s32 %s153, 1
    %p157 = scmp.eq.s32.totalorder %s14, 1
    %p158 = scmp.ne.s32.totalorder %s153, %s155
    %p159 = scmp.eq.s32.totalorder %s14, 0
    %p160 = por %p158, %p159
    %p161 = scmp.ne.s32.totalorder %s153, %s155
    %p162 = scmp.eq.s32.totalorder %s19, 1
    %p163 = por %p161, %p162
    %p164 = scmp.ne.s32.totalorder %s155, %s156
    %p165 = scmp.eq.s32.totalorder %s19, 0
    %p166 = por %p164, %p165
    %p167 = scmp.ne.s32.totalorder %s155, %s156
    %p168 = scmp.eq.s32.totalorder %s20, 1
    %p169 = por %p167, %p168
    %p171 = scmp.ne.s32.totalorder %s156, %s170
    %p172 = scmp.eq.s32.totalorder %s20, 0
    %p173 = por %p171, %p172
    %s174 = ssub.s32 %s14, %s21
    %p175 = scmp.eq.s32.totalorder %s174, 0
    %s177 = sadd.s32 %s176, 1
    %s178 = scalar_select %p175, %s176, %s177
    %p181 = pneg %p175
    %p182 = scmp.eq.s32.totalorder %s14, 1
    %p183 = por %p181, %p182
    %p184 = scmp.ne.s32.totalorder %s176, %s179
    %p185 = scmp.eq.s32.totalorder %s14, 0
    %p186 = por %p184, %p185
    %p187 = scmp.ne.s32.totalorder %s176, %s179
    %p188 = scmp.eq.s32.totalorder %s19, 1
    %p189 = por %p187, %p188
    %p190 = scmp.ne.s32.totalorder %s179, %s180
    %p191 = scmp.eq.s32.totalorder %s19, 0
    %p192 = por %p190, %p191
    %p193 = scmp.ne.s32.totalorder %s179, %s180
    %p194 = scmp.eq.s32.totalorder %s20, 1
    %p195 = por %p193, %p194
    %p197 = scmp.ne.s32.totalorder %s180, %s196
    %p198 = scmp.eq.s32.totalorder %s20, 0
    %p199 = por %p197, %p198
    %p200 = scmp.le.s32.totalorder 1, %s14
    %p201 = scmp.lt.s32.totalorder %s14, 3
    %p202 = pnand %p200, %p201
    %p203 = pneg %p202
    // Predicated region
    $region9: #{decoder_forward.1} parent=5 // pred_check
      _
    $region10: #{decoder_forward.1} parent=5 // pred_check_branch
      %205 = sbr.rel (%p202) target = $region12
    $region11: #{decoder_forward.1} parent=5 // pred_region
      %s206 = ssub.s32 %s14, 1
      // Predicated region
      $region13: #{decoder_forward.1} parent=11 // pred_check
        %p207 = pneg %p61
      $region14: #{decoder_forward.1} parent=11 // pred_check_branch
        %209 = sbr.rel (%p207) target = $region16
      $region15: #{decoder_forward.1} parent=11 // pred_region
        _
      $region16: #{decoder_forward.1} parent=11 // pred_fallthru
        _
      // Predicated region
      $region17: #{decoder_forward.1} parent=11 // pred_check
        %p210 = pneg %p82
      $region18: #{decoder_forward.1} parent=11 // pred_check_branch
        %212 = sbr.rel (%p210) target = $region20
      $region19: #{decoder_forward.1} parent=11 // pred_region
        _
      $region20: #{decoder_forward.1} parent=11 // pred_fallthru
        _
      // Predicated region
      $region21: #{decoder_forward.1} parent=11 // pred_check
        %p213 = pneg %p103
      $region22: #{decoder_forward.1} parent=11 // pred_check_branch
        %215 = sbr.rel (%p213) target = $region24
      $region23: #{decoder_forward.1} parent=11 // pred_region
        _
      $region24: #{decoder_forward.1} parent=11 // pred_fallthru
        _
      // Predicated region
      $region25: #{decoder_forward.1} parent=11 // pred_check
        %p216 = pneg %p124
      $region26: #{decoder_forward.1} parent=11 // pred_check_branch
        %218 = sbr.rel (%p216) target = $region28
      $region27: #{decoder_forward.1} parent=11 // pred_region
        _
      $region28: #{decoder_forward.1} parent=11 // pred_fallthru
        _
      // Predicated region
      $region29: #{decoder_forward.1} parent=11 // pred_check
        %p219 = pneg %p145
      $region30: #{decoder_forward.1} parent=11 // pred_check_branch
        %221 = sbr.rel (%p219) target = $region32
      $region31: #{decoder_forward.1} parent=11 // pred_region
        _
      $region32: #{decoder_forward.1} parent=11 // pred_fallthru
        _
      // Predicated region
      $region33: #{decoder_forward.1} parent=11 // pred_check
        %p222 = pneg %p166
      $region34: #{decoder_forward.1} parent=11 // pred_check_branch
        %224 = sbr.rel (%p222) target = $region36
      $region35: #{decoder_forward.1} parent=11 // pred_region
        _
      $region36: #{decoder_forward.1} parent=11 // pred_fallthru
        _
    $region12: #{decoder_forward.1} parent=5 // pred_fallthru
      _
    %p225 = scmp.lt.s32.totalorder %s14, 2
    // Predicated region
    $region37: #{decoder_forward.1} parent=5 // pred_check
      %p226 = pneg %p225
    $region38: #{decoder_forward.1} parent=5 // pred_check_branch
      %228 = sbr.rel (%p226) target = $region40
    $region39: #{decoder_forward.1} parent=5 // pred_region
      // Predicated region
      $region41: #{decoder_forward.1} parent=39 // pred_check
        %p229 = pneg %p34
      $region42: #{decoder_forward.1} parent=39 // pred_check_branch
        %231 = sbr.rel (%p229) target = $region44
      $region43: #{decoder_forward.1} parent=39 // pred_region
        %s232 = smul.u32 64, %s14
        %p233 = scmp.lt.s32.totalorder %s232, 127
        %s234 = scalar_select %p233, %s232, 127
        %s235 = smul.addr %s234, 8
        %s236 = scalar_lea.vmem %s0, %s235
        %s237 = smul.u32 64, %s14
      $region44: #{decoder_forward.1} parent=39 // pred_fallthru
        _
    $region40: #{decoder_forward.1} parent=5 // pred_fallthru
      _
    %p238 = scmp.le.s32.totalorder 1, %s14
    %p239 = scmp.lt.s32.totalorder %s14, 3
    %p240 = pnand %p238, %p239
    %p241 = pneg %p240
    // Predicated region
    $region45: #{decoder_forward.1} parent=5 // pred_check
      _
    $region46: #{decoder_forward.1} parent=5 // pred_check_branch
      %243 = sbr.rel (%p240) target = $region48
    $region47: #{decoder_forward.1} parent=5 // pred_region
      %s244 = ssub.s32 %s14, 1
      %s245 = smul.u32 64, %s19
      %p246 = scmp.lt.s32.totalorder %s245, 127
      %s247 = scalar_select %p246, %s245, 127
      %s248 = smul.addr %s247, 8
      %s249 = scalar_lea.vmem %s0, %s248
      %p250 = pneg %p40
      %p251 = pneg %p37
      %p252 = pneg %p61
      %p253 = pneg %p58
      %p254 = pneg %p82
      %p255 = pneg %p79
      %p256 = pneg %p103
      %p257 = pneg %p100
      %p258 = pneg %p124
      %p259 = pneg %p121
      %p260 = pneg %p145
      %p261 = pneg %p142
      %p262 = pneg %p166
      %p263 = pneg %p163
      %p264 = pneg %p192
      %p265 = pneg %p189
      %s266 = smul.u32 64, %s19
      %p267 = scmp.lt.s32.totalorder %s266, 127
      %s268 = scalar_select %p267, %s266, 127
      %s269 = smul.addr %s268, 8
      %s270 = scalar_lea.vmem %s7, %s269
      %s271 = smul.u32 64, %s19
      %p272 = scmp.lt.s32.totalorder %s271, 127
      %s273 = scalar_select %p272, %s271, 127
      %s274 = smul.addr %s273, 8
      %s275 = scalar_lea.vmem %s0, %s274
      %s276 = smul.u32 64, %s19
      %s277 = smul.u32 64, %s19
      %p278 = scmp.lt.s32.totalorder %s277, 127
      %s279 = scalar_select %p278, %s277, 127
      %s280 = smul.addr %s279, 8
      %s281 = scalar_lea.vmem %s7, %s280
      %s282 = smul.u32 64, %s19
      %v284 = vld [vmem:[%s275] sm:$0xff]
      %v285 = vld [vmem:[%s275 + $0x8] sm:$0xff]
      %v286 = vld [vmem:[%s275 + $0x10] sm:$0xff]
      %v287 = vld [vmem:[%s275 + $0x18] sm:$0xff]
      %v288 = vld [vmem:[%s275 + $0x20] sm:$0xff]
      %v289 = vld [vmem:[%s275 + $0x28] sm:$0xff]
      %v290 = vld [vmem:[%s275 + $0x30] sm:$0xff]
      %v291 = vld [vmem:[%s275 + $0x38] sm:$0xff]
      %v292 = vld [vmem:[%s275 + $0x40] sm:$0xff]
      %v293 = vld [vmem:[%s275 + $0x48] sm:$0xff]
      %v294 = vld [vmem:[%s275 + $0x50] sm:$0xff]
      %v295 = vld [vmem:[%s275 + $0x58] sm:$0xff]
      %v296 = vld [vmem:[%s275 + $0x60] sm:$0xff]
      %v297 = vld [vmem:[%s275 + $0x68] sm:$0xff]
      %v298 = vld [vmem:[%s275 + $0x70] sm:$0xff]
      %v299 = vld [vmem:[%s275 + $0x78] sm:$0xff]
      %v300 = vld [vmem:[%s275 + $0x80] sm:$0xff]
      %v301 = vld [vmem:[%s275 + $0x88] sm:$0xff]
      %v302 = vld [vmem:[%s275 + $0x90] sm:$0xff]
      %v303 = vld [vmem:[%s275 + $0x98] sm:$0xff]
      %v304 = vld [vmem:[%s275 + $0xa0] sm:$0xff]
      %v305 = vld [vmem:[%s275 + $0xa8] sm:$0xff]
      %v306 = vld [vmem:[%s275 + $0xb0] sm:$0xff]
      %v307 = vld [vmem:[%s275 + $0xb8] sm:$0xff]
      %v308 = vld [vmem:[%s275 + $0xc0] sm:$0xff]
      %v309 = vld [vmem:[%s275 + $0xc8] sm:$0xff]
      %v310 = vld [vmem:[%s275 + $0xd0] sm:$0xff]
      %v311 = vld [vmem:[%s275 + $0xd8] sm:$0xff]
      %v312 = vld [vmem:[%s275 + $0xe0] sm:$0xff]
      %v313 = vld [vmem:[%s275 + $0xe8] sm:$0xff]
      %v314 = vld [vmem:[%s275 + $0xf0] sm:$0xff]
      %v315 = vld [vmem:[%s275 + $0xf8] sm:$0xff]
      %v316 = vld [vmem:[%s275 + $0x100] sm:$0xff]
      %v317 = vld [vmem:[%s275 + $0x108] sm:$0xff]
      %v318 = vld [vmem:[%s275 + $0x110] sm:$0xff]
      %v319 = vld [vmem:[%s275 + $0x118] sm:$0xff]
      %v320 = vld [vmem:[%s275 + $0x120] sm:$0xff]
      %v321 = vld [vmem:[%s275 + $0x128] sm:$0xff]
      %v322 = vld [vmem:[%s275 + $0x130] sm:$0xff]
      %v323 = vld [vmem:[%s275 + $0x138] sm:$0xff]
      %v324 = vld [vmem:[%s275 + $0x140] sm:$0xff]
      %v325 = vld [vmem:[%s275 + $0x148] sm:$0xff]
      %v326 = vld [vmem:[%s275 + $0x150] sm:$0xff]
      %v327 = vld [vmem:[%s275 + $0x158] sm:$0xff]
      %v328 = vld [vmem:[%s275 + $0x160] sm:$0xff]
      %v329 = vld [vmem:[%s275 + $0x168] sm:$0xff]
      %v330 = vld [vmem:[%s275 + $0x170] sm:$0xff]
      %v331 = vld [vmem:[%s275 + $0x178] sm:$0xff]
      %v332 = vld [vmem:[%s275 + $0x180] sm:$0xff]
      %v333 = vld [vmem:[%s275 + $0x188] sm:$0xff]
      %v334 = vld [vmem:[%s275 + $0x190] sm:$0xff]
      %v335 = vld [vmem:[%s275 + $0x198] sm:$0xff]
      %v336 = vld [vmem:[%s275 + $0x1a0] sm:$0xff]
      %v337 = vld [vmem:[%s275 + $0x1a8] sm:$0xff]
      %v338 = vld [vmem:[%s275 + $0x1b0] sm:$0xff]
      %v339 = vld [vmem:[%s275 + $0x1b8] sm:$0xff]
      %v340 = vld [vmem:[%s275 + $0x1c0] sm:$0xff]
      %v341 = vld [vmem:[%s275 + $0x1c8] sm:$0xff]
      %v342 = vld [vmem:[%s275 + $0x1d0] sm:$0xff]
      %v343 = vld [vmem:[%s275 + $0x1d8] sm:$0xff]
      %v344 = vld [vmem:[%s275 + $0x1e0] sm:$0xff]
      %v345 = vld [vmem:[%s275 + $0x1e8] sm:$0xff]
      %v346 = vld [vmem:[%s275 + $0x1f0] sm:$0xff]
      %v347 = vld [vmem:[%s275 + $0x1f8] sm:$0xff]
      %v348 = vpack.c.bf16 %v285, %v284
      %v349 = vpack.c.bf16 %v287, %v286
      %v350 = vpack.c.bf16 %v289, %v288
      %v351 = vpack.c.bf16 %v291, %v290
      %v352 = vpack.c.bf16 %v293, %v292
      %v353 = vpack.c.bf16 %v295, %v294
      %v354 = vpack.c.bf16 %v297, %v296
      %v355 = vpack.c.bf16 %v299, %v298
      %v356 = vpack.c.bf16 %v301, %v300
      %v357 = vpack.c.bf16 %v303, %v302
      %v358 = vpack.c.bf16 %v305, %v304
      %v359 = vpack.c.bf16 %v307, %v306
      %v360 = vpack.c.bf16 %v309, %v308
      %v361 = vpack.c.bf16 %v311, %v310
      %v362 = vpack.c.bf16 %v313, %v312
      %v363 = vpack.c.bf16 %v315, %v314
      %v364 = vpack.c.bf16 %v317, %v316
      %v365 = vpack.c.bf16 %v319, %v318
      %v366 = vpack.c.bf16 %v321, %v320
      %v367 = vpack.c.bf16 %v323, %v322
      %v368 = vpack.c.bf16 %v325, %v324
      %v369 = vpack.c.bf16 %v327, %v326
      %v370 = vpack.c.bf16 %v329, %v328
      %v371 = vpack.c.bf16 %v331, %v330
      %v372 = vpack.c.bf16 %v333, %v332
      %v373 = vpack.c.bf16 %v335, %v334
      %v374 = vpack.c.bf16 %v337, %v336
      %v375 = vpack.c.bf16 %v339, %v338
      %v376 = vpack.c.bf16 %v341, %v340
      %v377 = vpack.c.bf16 %v343, %v342
      %v378 = vpack.c.bf16 %v345, %v344
      %v379 = vpack.c.bf16 %v347, %v346
      %v380 = vld [vmem:[%s1] sm:$0xf]
      %v381 = vld [vmem:[%s1 + $0x4] sm:$0xf]
      %v382 = vld [vmem:[%s2] sm:$0x1]
      %v384 = vlaneseq
      %v385 = vshrl.u32 %v384, 7
      %v386 = vsub.s32 0, %v385
      %v387 = vrot.slane %v382, %v386
      %v391 = vunpack.c.l.b16 %v380
      %v392 = vunpack.c.l.b16 %v381
      %v393 = vpack.c.b16 %v392, %v391
      %vm395 = vcmask 130048
      %v397 = vsel %vm395, %v348, 0
      %v400 = vsel %vm395, %v349, 0
      %v403 = vsel %vm395, %v350, 0
      %v406 = vsel %vm395, %v351, 0
      %v409 = vsel %vm395, %v352, 0
      %v412 = vsel %vm395, %v353, 0
      %v415 = vsel %vm395, %v354, 0
      %v418 = vsel %vm395, %v355, 0
      %v421 = vsel %vm395, %v356, 0
      %v424 = vsel %vm395, %v357, 0
      %v427 = vsel %vm395, %v358, 0
      %v430 = vsel %vm395, %v359, 0
      %v433 = vsel %vm395, %v360, 0
      %v436 = vsel %vm395, %v361, 0
      %v439 = vsel %vm395, %v362, 0
      %v442 = vsel %vm395, %v363, 0
      %v445 = vsel %vm395, %v364, 0
      %v448 = vsel %vm395, %v365, 0
      %v451 = vsel %vm395, %v366, 0
      %v454 = vsel %vm395, %v367, 0
      %v457 = vsel %vm395, %v368, 0
      %v460 = vsel %vm395, %v369, 0
      %v463 = vsel %vm395, %v370, 0
      %v466 = vsel %vm395, %v371, 0
      %v469 = vsel %vm395, %v372, 0
      %v472 = vsel %vm395, %v373, 0
      %v475 = vsel %vm395, %v374, 0
      %v478 = vsel %vm395, %v375, 0
      %v481 = vsel %vm395, %v376, 0
      %v484 = vsel %vm395, %v377, 0
      %v487 = vsel %vm395, %v378, 0
      %v490 = vsel %vm395, %v379, 0
      %492 = vmatprep.subr.bf16.mxu0 0
      %493 = vmatpush1.bf16.msra.mxu0 %v393
      %494 = vmatprep.subr.bf16.mxu0 0
      %495 = vmatpush1.bf16.msra.mxu0 0
      %496 = vmatprep.subr.bf16.mxu0 0
      %497 = vmatpush1.bf16.msra.mxu0 0
      %498 = vmatprep.subr.bf16.mxu0 0
      %499 = vmatpush1.bf16.msra.mxu0 0
      %500 = vmatprep.subr.bf16.mxu0 0
      %501 = vmatpush1.bf16.msra.mxu0 0
      %502 = vmatprep.subr.bf16.mxu0 0
      %503 = vmatpush1.bf16.msra.mxu0 0
      %504 = vmatprep.subr.bf16.mxu0 0
      %505 = vmatpush1.bf16.msra.mxu0 0
      %506 = vmatprep.subr.bf16.mxu0 0
      %507 = vmatpush1.bf16.msra.mxu0 0
      %508 = vmatprep.subr.bf16.mxu0 0
      %509 = vmatpush1.bf16.msra.mxu0 0
      %510 = vmatprep.subr.bf16.mxu0 0
      %511 = vmatpush1.bf16.msra.mxu0 0
      %512 = vmatprep.subr.bf16.mxu0 0
      %513 = vmatpush1.bf16.msra.mxu0 0
      %514 = vmatprep.subr.bf16.mxu0 0
      %515 = vmatpush1.bf16.msra.mxu0 0
      %516 = vmatprep.subr.bf16.mxu0 0
      %517 = vmatpush1.bf16.msra.mxu0 0
      %518 = vmatprep.subr.bf16.mxu0 0
      %519 = vmatpush1.bf16.msra.mxu0 0
      %520 = vmatprep.subr.bf16.mxu0 0
      %521 = vmatpush1.bf16.msra.mxu0 0
      %522 = vmatprep.subr.bf16.mxu0 0
      %523 = vmatpush1.bf16.msra.mxu0 0
      %524 = vmatprep.mubr.bf16.mxu0 0
      %525 = vmatmul.mubr.bf16.gmra.mrb[0].mxu0 %v397
      %v526 = vpop.f32.mrb[0].mxu0
      %v527 = vadd.f32 %v387, %v526
      %v528 = vpop.f32.mrb[0].mxu0
      %v529 = vpop.f32.mrb[0].mxu0
      %v530 = vadd.f32 %v387, %v529
      %v531 = vpop.f32.mrb[0].mxu0
      %532 = vmatprep.mubr.bf16.mxu0 0
      %533 = vmatmul.mubr.bf16.gmra.mrb[0].mxu0 %v400
      %v534 = vpop.f32.mrb[0].mxu0
      %v535 = vadd.f32 %v387, %v534
      %v536 = vpop.f32.mrb[0].mxu0
      %v537 = vpop.f32.mrb[0].mxu0
      %v538 = vadd.f32 %v387, %v537
      %v539 = vpop.f32.mrb[0].mxu0
      %540 = vmatprep.mubr.bf16.mxu0 0
      %541 = vmatmul.mubr.bf16.gmra.mrb[0].mxu0 %v403
      %v542 = vpop.f32.mrb[0].mxu0
      %v543 = vadd.f32 %v387, %v542
      %v544 = vpop.f32.mrb[0].mxu0
      %v545 = vpop.f32.mrb[0].mxu0
      %v546 = vadd.f32 %v387, %v545
      %v547 = vpop.f32.mrb[0].mxu0
      %548 = vmatprep.mubr.bf16.mxu0 0
      %549 = vmatmul.mubr.bf16.gmra.mrb[0].mxu0 %v406
      %v550 = vpop.f32.mrb[0].mxu0
      %v551 = vadd.f32 %v387, %v550
      %v552 = vpop.f32.mrb[0].mxu0
      %v553 = vpop.f32.mrb[0].mxu0
      %v554 = vadd.f32 %v387, %v553
      %v555 = vpop.f32.mrb[0].mxu0
      %556 = vmatprep.mubr.bf16.mxu0 0
      %557 = vmatmul.mubr.bf16.gmra.mrb[0].mxu0 %v409
      %v558 = vpop.f32.mrb[0].mxu0
      %v559 = vadd.f32 %v387, %v558
      %v560 = vpop.f32.mrb[0].mxu0
      %v561 = vpop.f32.mrb[0].mxu0
      %v562 = vadd.f32 %v387, %v561
      %v563 = vpop.f32.mrb[0].mxu0
      %564 = vmatprep.mubr.bf16.mxu0 0
      %565 = vmatmul.mubr.bf16.gmra.mrb[0].mxu0 %v412
      %v566 = vpop.f32.mrb[0].mxu0
      %v567 = vadd.f32 %v387, %v566
      %v568 = vpop.f32.mrb[0].mxu0
      %v569 = vpop.f32.mrb[0].mxu0
      %v570 = vadd.f32 %v387, %v569
      %v571 = vpop.f32.mrb[0].mxu0
      %572 = vmatprep.mubr.bf16.mxu0 0
      %573 = vmatmul.mubr.bf16.gmra.mrb[0].mxu0 %v415
      %v574 = vpop.f32.mrb[0].mxu0
      %v575 = vadd.f32 %v387, %v574
      %v576 = vpop.f32.mrb[0].mxu0
      %v577 = vpop.f32.mrb[0].mxu0
      %v578 = vadd.f32 %v387, %v577
      %v579 = vpop.f32.mrb[0].mxu0
      %580 = vmatprep.mubr.bf16.mxu0 0
      %581 = vmatmul.mubr.bf16.gmra.mrb[0].mxu0 %v418
      %v582 = vpop.f32.mrb[0].mxu0
      %v583 = vadd.f32 %v387, %v582
      %v584 = vpop.f32.mrb[0].mxu0
      %v585 = vpop.f32.mrb[0].mxu0
      %v586 = vadd.f32 %v387, %v585
      %v587 = vpop.f32.mrb[0].mxu0
      %588 = vmatprep.mubr.bf16.mxu0 0
      %589 = vmatmul.mubr.bf16.gmra.mrb[0].mxu0 %v421
      %v590 = vpop.f32.mrb[0].mxu0
      %v591 = vadd.f32 %v387, %v590
      %v592 = vpop.f32.mrb[0].mxu0
      %v593 = vpop.f32.mrb[0].mxu0
      %v594 = vadd.f32 %v387, %v593
      %v595 = vpop.f32.mrb[0].mxu0
      %596 = vmatprep.mubr.bf16.mxu0 0
      %597 = vmatmul.mubr.bf16.gmra.mrb[0].mxu0 %v424
      %v598 = vpop.f32.mrb[0].mxu0
      %v599 = vadd.f32 %v387, %v598
      %v600 = vpop.f32.mrb[0].mxu0
      %v601 = vpop.f32.mrb[0].mxu0
      %v602 = vadd.f32 %v387, %v601
      %v603 = vpop.f32.mrb[0].mxu0
      %604 = vmatprep.mubr.bf16.mxu0 0
      %605 = vmatmul.mubr.bf16.gmra.mrb[0].mxu0 %v427
      %v606 = vpop.f32.mrb[0].mxu0
      %v607 = vadd.f32 %v387, %v606
      %v608 = vpop.f32.mrb[0].mxu0
      %v609 = vpop.f32.mrb[0].mxu0
      %v610 = vadd.f32 %v387, %v609
      %v611 = vpop.f32.mrb[0].mxu0
      %612 = vmatprep.mubr.bf16.mxu0 0
      %613 = vmatmul.mubr.bf16.gmra.mrb[0].mxu0 %v430
      %v614 = vpop.f32.mrb[0].mxu0
      %v615 = vadd.f32 %v387, %v614
      %v616 = vpop.f32.mrb[0].mxu0
      %v617 = vpop.f32.mrb[0].mxu0
      %v618 = vadd.f32 %v387, %v617
      %v619 = vpop.f32.mrb[0].mxu0
      %620 = vmatprep.mubr.bf16.mxu0 0
      %621 = vmatmul.mubr.bf16.gmra.mrb[0].mxu0 %v433
      %v622 = vpop.f32.mrb[0].mxu0
      %v623 = vadd.f32 %v387, %v622
      %v624 = vpop.f32.mrb[0].mxu0
      %v625 = vpop.f32.mrb[0].mxu0
      %v626 = vadd.f32 %v387, %v625
      %v627 = vpop.f32.mrb[0].mxu0
      %628 = vmatprep.mubr.bf16.mxu0 0
      %629 = vmatmul.mubr.bf16.gmra.mrb[0].mxu0 %v436
      %v630 = vpop.f32.mrb[0].mxu0
      %v631 = vadd.f32 %v387, %v630
      %v632 = vpop.f32.mrb[0].mxu0
      %v633 = vpop.f32.mrb[0].mxu0
      %v634 = vadd.f32 %v387, %v633
      %v635 = vpop.f32.mrb[0].mxu0
      %636 = vmatprep.mubr.bf16.mxu0 0
      %637 = vmatmul.mubr.bf16.gmra.mrb[0].mxu0 %v439
      %v638 = vpop.f32.mrb[0].mxu0
      %v639 = vadd.f32 %v387, %v638
      %v640 = vpop.f32.mrb[0].mxu0
      %v641 = vpop.f32.mrb[0].mxu0
      %v642 = vadd.f32 %v387, %v641
      %v643 = vpop.f32.mrb[0].mxu0
      %644 = vmatprep.mubr.bf16.mxu0 0
      %645 = vmatmul.mubr.bf16.gmra.mrb[0].mxu0 %v442
      %v646 = vpop.f32.mrb[0].mxu0
      %v647 = vadd.f32 %v387, %v646
      %v648 = vpop.f32.mrb[0].mxu0
      %v649 = vpop.f32.mrb[0].mxu0
      %v650 = vadd.f32 %v387, %v649
      %v651 = vpop.f32.mrb[0].mxu0
      %652 = vmatprep.mubr.bf16.mxu0 0
      %653 = vmatmul.mubr.bf16.gmra.mrb[0].mxu0 %v445
      %v654 = vpop.f32.mrb[0].mxu0
      %v655 = vadd.f32 %v387, %v654
      %v656 = vpop.f32.mrb[0].mxu0
      %v657 = vpop.f32.mrb[0].mxu0
      %v658 = vadd.f32 %v387, %v657
      %v659 = vpop.f32.mrb[0].mxu0
      %660 = vmatprep.mubr.bf16.mxu0 0
      %661 = vmatmul.mubr.bf16.gmra.mrb[0].mxu0 %v448
      %v662 = vpop.f32.mrb[0].mxu0
      %v663 = vadd.f32 %v387, %v662
      %v664 = vpop.f32.mrb[0].mxu0
      %v665 = vpop.f32.mrb[0].mxu0
      %v666 = vadd.f32 %v387, %v665
      %v667 = vpop.f32.mrb[0].mxu0
      %668 = vmatprep.mubr.bf16.mxu0 0
      %669 = vmatmul.mubr.bf16.gmra.mrb[0].mxu0 %v451
      %v670 = vpop.f32.mrb[0].mxu0
      %v671 = vadd.f32 %v387, %v670
      %v672 = vpop.f32.mrb[0].mxu0
      %v673 = vpop.f32.mrb[0].mxu0
      %v674 = vadd.f32 %v387, %v673
      %v675 = vpop.f32.mrb[0].mxu0
      %676 = vmatprep.mubr.bf16.mxu0 0
      %677 = vmatmul.mubr.bf16.gmra.mrb[0].mxu0 %v454
      %v678 = vpop.f32.mrb[0].mxu0
      %v679 = vadd.f32 %v387, %v678
      %v680 = vpop.f32.mrb[0].mxu0
      %v681 = vpop.f32.mrb[0].mxu0
      %v682 = vadd.f32 %v387, %v681
      %v683 = vpop.f32.mrb[0].mxu0
      %684 = vmatprep.mubr.bf16.mxu0 0
      %685 = vmatmul.mubr.bf16.gmra.mrb[0].mxu0 %v457
      %v686 = vpop.f32.mrb[0].mxu0
      %v687 = vadd.f32 %v387, %v686
      %v688 = vpop.f32.mrb[0].mxu0
      %v689 = vpop.f32.mrb[0].mxu0
      %v690 = vadd.f32 %v387, %v689
      %v691 = vpop.f32.mrb[0].mxu0
      %692 = vmatprep.mubr.bf16.mxu0 0
      %693 = vmatmul.mubr.bf16.gmra.mrb[0].mxu0 %v460
      %v694 = vpop.f32.mrb[0].mxu0
      %v695 = vadd.f32 %v387, %v694
      %v696 = vpop.f32.mrb[0].mxu0
      %v697 = vpop.f32.mrb[0].mxu0
      %v698 = vadd.f32 %v387, %v697
      %v699 = vpop.f32.mrb[0].mxu0
      %700 = vmatprep.mubr.bf16.mxu0 0
      %701 = vmatmul.mubr.bf16.gmra.mrb[0].mxu0 %v463
      %v702 = vpop.f32.mrb[0].mxu0
      %v703 = vadd.f32 %v387, %v702
      %v704 = vpop.f32.mrb[0].mxu0
      %v705 = vpop.f32.mrb[0].mxu0
      %v706 = vadd.f32 %v387, %v705
      %v707 = vpop.f32.mrb[0].mxu0
      %708 = vmatprep.mubr.bf16.mxu0 0
      %709 = vmatmul.mubr.bf16.gmra.mrb[0].mxu0 %v466
      %v710 = vpop.f32.mrb[0].mxu0
      %v711 = vadd.f32 %v387, %v710
      %v712 = vpop.f32.mrb[0].mxu0
      %v713 = vpop.f32.mrb[0].mxu0
      %v714 = vadd.f32 %v387, %v713
      %v715 = vpop.f32.mrb[0].mxu0
      %716 = vmatprep.mubr.bf16.mxu0 0
      %717 = vmatmul.mubr.bf16.gmra.mrb[0].mxu0 %v469
      %v718 = vpop.f32.mrb[0].mxu0
      %v719 = vadd.f32 %v387, %v718
      %v720 = vpop.f32.mrb[0].mxu0
      %v721 = vpop.f32.mrb[0].mxu0
      %v722 = vadd.f32 %v387, %v721
      %v723 = vpop.f32.mrb[0].mxu0
      %724 = vmatprep.mubr.bf16.mxu0 0
      %725 = vmatmul.mubr.bf16.gmra.mrb[0].mxu0 %v472
      %v726 = vpop.f32.mrb[0].mxu0
      %v727 = vadd.f32 %v387, %v726
      %v728 = vpop.f32.mrb[0].mxu0
      %v729 = vpop.f32.mrb[0].mxu0
      %v730 = vadd.f32 %v387, %v729
      %v731 = vpop.f32.mrb[0].mxu0
      %732 = vmatprep.mubr.bf16.mxu0 0
      %733 = vmatmul.mubr.bf16.gmra.mrb[0].mxu0 %v475
      %v734 = vpop.f32.mrb[0].mxu0
      %v735 = vadd.f32 %v387, %v734
      %v736 = vpop.f32.mrb[0].mxu0
      %v737 = vpop.f32.mrb[0].mxu0
      %v738 = vadd.f32 %v387, %v737
      %v739 = vpop.f32.mrb[0].mxu0
      %740 = vmatprep.mubr.bf16.mxu0 0
      %741 = vmatmul.mubr.bf16.gmra.mrb[0].mxu0 %v478
      %v742 = vpop.f32.mrb[0].mxu0
      %v743 = vadd.f32 %v387, %v742
      %v744 = vpop.f32.mrb[0].mxu0
      %v745 = vpop.f32.mrb[0].mxu0
      %v746 = vadd.f32 %v387, %v745
      %v747 = vpop.f32.mrb[0].mxu0
      %748 = vmatprep.mubr.bf16.mxu0 0
      %749 = vmatmul.mubr.bf16.gmra.mrb[0].mxu0 %v481
      %v750 = vpop.f32.mrb[0].mxu0
      %v751 = vadd.f32 %v387, %v750
      %v752 = vpop.f32.mrb[0].mxu0
      %v753 = vpop.f32.mrb[0].mxu0
      %v754 = vadd.f32 %v387, %v753
      %v755 = vpop.f32.mrb[0].mxu0
      %756 = vmatprep.mubr.bf16.mxu0 0
      %757 = vmatmul.mubr.bf16.gmra.mrb[0].mxu0 %v484
      %v758 = vpop.f32.mrb[0].mxu0
      %v759 = vadd.f32 %v387, %v758
      %v760 = vpop.f32.mrb[0].mxu0
      %v761 = vpop.f32.mrb[0].mxu0
      %v762 = vadd.f32 %v387, %v761
      %v763 = vpop.f32.mrb[0].mxu0
      %764 = vmatprep.mubr.bf16.mxu0 0
      %765 = vmatmul.mubr.bf16.gmra.mrb[0].mxu0 %v487
      %v766 = vpop.f32.mrb[0].mxu0
      %v767 = vadd.f32 %v387, %v766
      %v768 = vpop.f32.mrb[0].mxu0
      %v769 = vpop.f32.mrb[0].mxu0
      %v770 = vadd.f32 %v387, %v769
      %v771 = vpop.f32.mrb[0].mxu0
      %772 = vmatprep.mubr.bf16.mxu0 0
      %773 = vmatmul.mubr.bf16.gmra.mrb[0].mxu0 %v490
      %v774 = vpop.f32.mrb[0].mxu0
      %v775 = vadd.f32 %v387, %v774
      %v776 = vpop.f32.mrb[0].mxu0
      %v777 = vpop.f32.mrb[0].mxu0
      %v778 = vadd.f32 %v387, %v777
      %v779 = vpop.f32.mrb[0].mxu0
      %780 = vdwg.mxu0
      %vm781 = vcmp.ge.f32.partialorder %v527, 0.0
      %vm782 = vcmp.ge.f32.partialorder %v530, 0.0
      %vm783 = vcmp.ge.f32.partialorder %v535, 0.0
      %vm784 = vcmp.ge.f32.partialorder %v538, 0.0
      %vm785 = vcmp.ge.f32.partialorder %v543, 0.0
      %vm786 = vcmp.ge.f32.partialorder %v546, 0.0
      %vm787 = vcmp.ge.f32.partialorder %v551, 0.0
      %vm788 = vcmp.ge.f32.partialorder %v554, 0.0
      %vm789 = vcmp.ge.f32.partialorder %v559, 0.0
      %vm790 = vcmp.ge.f32.partialorder %v562, 0.0
      %vm791 = vcmp.ge.f32.partialorder %v567, 0.0
      %vm792 = vcmp.ge.f32.partialorder %v570, 0.0
      %vm793 = vcmp.ge.f32.partialorder %v575, 0.0
      %vm794 = vcmp.ge.f32.partialorder %v578, 0.0
      %vm795 = vcmp.ge.f32.partialorder %v583, 0.0
      %vm796 = vcmp.ge.f32.partialorder %v586, 0.0
      %vm797 = vcmp.ge.f32.partialorder %v591, 0.0
      %vm798 = vcmp.ge.f32.partialorder %v594, 0.0
      %vm799 = vcmp.ge.f32.partialorder %v599, 0.0
      %vm800 = vcmp.ge.f32.partialorder %v602, 0.0
      %vm801 = vcmp.ge.f32.partialorder %v607, 0.0
      %vm802 = vcmp.ge.f32.partialorder %v610, 0.0
      %vm803 = vcmp.ge.f32.partialorder %v615, 0.0
      %vm804 = vcmp.ge.f32.partialorder %v618, 0.0
      %vm805 = vcmp.ge.f32.partialorder %v623, 0.0
      %vm806 = vcmp.ge.f32.partialorder %v626, 0.0
      %vm807 = vcmp.ge.f32.partialorder %v631, 0.0
      %vm808 = vcmp.ge.f32.partialorder %v634, 0.0
      %vm809 = vcmp.ge.f32.partialorder %v639, 0.0
      %vm810 = vcmp.ge.f32.partialorder %v642, 0.0
      %vm811 = vcmp.ge.f32.partialorder %v647, 0.0
      %vm812 = vcmp.ge.f32.partialorder %v650, 0.0
      %vm813 = vcmp.ge.f32.partialorder %v655, 0.0
      %vm814 = vcmp.ge.f32.partialorder %v658, 0.0
      %vm815 = vcmp.ge.f32.partialorder %v663, 0.0
      %vm816 = vcmp.ge.f32.partialorder %v666, 0.0
      %vm817 = vcmp.ge.f32.partialorder %v671, 0.0
      %vm818 = vcmp.ge.f32.partialorder %v674, 0.0
      %vm819 = vcmp.ge.f32.partialorder %v679, 0.0
      %vm820 = vcmp.ge.f32.partialorder %v682, 0.0
      %vm821 = vcmp.ge.f32.partialorder %v687, 0.0
      %vm822 = vcmp.ge.f32.partialorder %v690, 0.0
      %vm823 = vcmp.ge.f32.partialorder %v695, 0.0
      %vm824 = vcmp.ge.f32.partialorder %v698, 0.0
      %vm825 = vcmp.ge.f32.partialorder %v703, 0.0
      %vm826 = vcmp.ge.f32.partialorder %v706, 0.0
      %vm827 = vcmp.ge.f32.partialorder %v711, 0.0
      %vm828 = vcmp.ge.f32.partialorder %v714, 0.0
      %vm829 = vcmp.ge.f32.partialorder %v719, 0.0
      %vm830 = vcmp.ge.f32.partialorder %v722, 0.0
      %vm831 = vcmp.ge.f32.partialorder %v727, 0.0
      %vm832 = vcmp.ge.f32.partialorder %v730, 0.0
      %vm833 = vcmp.ge.f32.partialorder %v735, 0.0
      %vm834 = vcmp.ge.f32.partialorder %v738, 0.0
      %vm835 = vcmp.ge.f32.partialorder %v743, 0.0
      %vm836 = vcmp.ge.f32.partialorder %v746, 0.0
      %vm837 = vcmp.ge.f32.partialorder %v751, 0.0
      %vm838 = vcmp.ge.f32.partialorder %v754, 0.0
      %vm839 = vcmp.ge.f32.partialorder %v759, 0.0
      %vm840 = vcmp.ge.f32.partialorder %v762, 0.0
      %vm841 = vcmp.ge.f32.partialorder %v767, 0.0
      %vm842 = vcmp.ge.f32.partialorder %v770, 0.0
      %vm843 = vcmp.ge.f32.partialorder %v775, 0.0
      %vm844 = vcmp.ge.f32.partialorder %v778, 0.0
      %v845 = vmul.f32 %v527, 0.22916667
      %v846 = vmul.f32 %v530, 0.22916667
      %v847 = vmul.f32 %v535, 0.22916667
      %v848 = vmul.f32 %v538, 0.22916667
      %v849 = vmul.f32 %v543, 0.22916667
      %v850 = vmul.f32 %v546, 0.22916667
      %v851 = vmul.f32 %v551, 0.22916667
      %v852 = vmul.f32 %v554, 0.22916667
      %v853 = vmul.f32 %v559, 0.22916667
      %v854 = vmul.f32 %v562, 0.22916667
      %v855 = vmul.f32 %v567, 0.22916667
      %v856 = vmul.f32 %v570, 0.22916667
      %v857 = vmul.f32 %v575, 0.22916667
      %v858 = vmul.f32 %v578, 0.22916667
      %v859 = vmul.f32 %v583, 0.22916667
      %v860 = vmul.f32 %v586, 0.22916667
      %v861 = vmul.f32 %v591, 0.22916667
      %v862 = vmul.f32 %v594, 0.22916667
      %v863 = vmul.f32 %v599, 0.22916667
      %v864 = vmul.f32 %v602, 0.22916667
      %v865 = vmul.f32 %v607, 0.22916667
      %v866 = vmul.f32 %v610, 0.22916667
      %v867 = vmul.f32 %v615, 0.22916667
      %v868 = vmul.f32 %v618, 0.22916667
      %v869 = vmul.f32 %v623, 0.22916667
      %v870 = vmul.f32 %v626, 0.22916667
      %v871 = vmul.f32 %v631, 0.22916667
      %v872 = vmul.f32 %v634, 0.22916667
      %v873 = vmul.f32 %v639, 0.22916667
      %v874 = vmul.f32 %v642, 0.22916667
      %v875 = vmul.f32 %v647, 0.22916667
      %v876 = vmul.f32 %v650, 0.22916667
      %v877 = vmul.f32 %v655, 0.22916667
      %v878 = vmul.f32 %v658, 0.22916667
      %v879 = vmul.f32 %v663, 0.22916667
      %v880 = vmul.f32 %v666, 0.22916667
      %v881 = vmul.f32 %v671, 0.22916667
      %v882 = vmul.f32 %v674, 0.22916667
      %v883 = vmul.f32 %v679, 0.22916667
      %v884 = vmul.f32 %v682, 0.22916667
      %v885 = vmul.f32 %v687, 0.22916667
      %v886 = vmul.f32 %v690, 0.22916667
      %v887 = vmul.f32 %v695, 0.22916667
      %v888 = vmul.f32 %v698, 0.22916667
      %v889 = vmul.f32 %v703, 0.22916667
      %v890 = vmul.f32 %v706, 0.22916667
      %v891 = vmul.f32 %v711, 0.22916667
      %v892 = vmul.f32 %v714, 0.22916667
      %v893 = vmul.f32 %v719, 0.22916667
      %v894 = vmul.f32 %v722, 0.22916667
      %v895 = vmul.f32 %v727, 0.22916667
      %v896 = vmul.f32 %v730, 0.22916667
      %v897 = vmul.f32 %v735, 0.22916667
      %v898 = vmul.f32 %v738, 0.22916667
      %v899 = vmul.f32 %v743, 0.22916667
      %v900 = vmul.f32 %v746, 0.22916667
      %v901 = vmul.f32 %v751, 0.22916667
      %v902 = vmul.f32 %v754, 0.22916667
      %v903 = vmul.f32 %v759, 0.22916667
      %v904 = vmul.f32 %v762, 0.22916667
      %v905 = vmul.f32 %v767, 0.22916667
      %v906 = vmul.f32 %v770, 0.22916667
      %v907 = vmul.f32 %v775, 0.22916667
      %v908 = vmul.f32 %v778, 0.22916667
      %v909 = vsel %vm781, %v527, %v845
      %v910 = vsel %vm782, %v530, %v846
      %v911 = vsel %vm783, %v535, %v847
      %v912 = vsel %vm784, %v538, %v848
      %v913 = vsel %vm785, %v543, %v849
      %v914 = vsel %vm786, %v546, %v850
      %v915 = vsel %vm787, %v551, %v851
      %v916 = vsel %vm788, %v554, %v852
      %v917 = vsel %vm789, %v559, %v853
      %v918 = vsel %vm790, %v562, %v854
      %v919 = vsel %vm791, %v567, %v855
      %v920 = vsel %vm792, %v570, %v856
      %v921 = vsel %vm793, %v575, %v857
      %v922 = vsel %vm794, %v578, %v858
      %v923 = vsel %vm795, %v583, %v859
      %v924 = vsel %vm796, %v586, %v860
      %v925 = vsel %vm797, %v591, %v861
      %v926 = vsel %vm798, %v594, %v862
      %v927 = vsel %vm799, %v599, %v863
      %v928 = vsel %vm800, %v602, %v864
      %v929 = vsel %vm801, %v607, %v865
      %v930 = vsel %vm802, %v610, %v866
      %v931 = vsel %vm803, %v615, %v867
      %v932 = vsel %vm804, %v618, %v868
      %v933 = vsel %vm805, %v623, %v869
      %v934 = vsel %vm806, %v626, %v870
      %v935 = vsel %vm807, %v631, %v871
      %v936 = vsel %vm808, %v634, %v872
      %v937 = vsel %vm809, %v639, %v873
      %v938 = vsel %vm810, %v642, %v874
      %v939 = vsel %vm811, %v647, %v875
      %v940 = vsel %vm812, %v650, %v876
      %v941 = vsel %vm813, %v655, %v877
      %v942 = vsel %vm814, %v658, %v878
      %v943 = vsel %vm815, %v663, %v879
      %v944 = vsel %vm816, %v666, %v880
      %v945 = vsel %vm817, %v671, %v881
      %v946 = vsel %vm818, %v674, %v882
      %v947 = vsel %vm819, %v679, %v883
      %v948 = vsel %vm820, %v682, %v884
      %v949 = vsel %vm821, %v687, %v885
      %v950 = vsel %vm822, %v690, %v886
      %v951 = vsel %vm823, %v695, %v887
      %v952 = vsel %vm824, %v698, %v888
      %v953 = vsel %vm825, %v703, %v889
      %v954 = vsel %vm826, %v706, %v890
      %v955 = vsel %vm827, %v711, %v891
      %v956 = vsel %vm828, %v714, %v892
      %v957 = vsel %vm829, %v719, %v893
      %v958 = vsel %vm830, %v722, %v894
      %v959 = vsel %vm831, %v727, %v895
      %v960 = vsel %vm832, %v730, %v896
      %v961 = vsel %vm833, %v735, %v897
      %v962 = vsel %vm834, %v738, %v898
      %v963 = vsel %vm835, %v743, %v899
      %v964 = vsel %vm836, %v746, %v900
      %v965 = vsel %vm837, %v751, %v901
      %v966 = vsel %vm838, %v754, %v902
      %v967 = vsel %vm839, %v759, %v903
      %v968 = vsel %vm840, %v762, %v904
      %v969 = vsel %vm841, %v767, %v905
      %v970 = vsel %vm842, %v770, %v906
      %v971 = vsel %vm843, %v775, %v907
      %v972 = vsel %vm844, %v778, %v908
      %v973 = vpack.c.bf16 %v910, %v909
      %v974 = vpack.c.bf16 %v912, %v911
      %v975 = vpack.c.bf16 %v914, %v913
      %v976 = vpack.c.bf16 %v916, %v915
      %v977 = vpack.c.bf16 %v918, %v917
      %v978 = vpack.c.bf16 %v920, %v919
      %v979 = vpack.c.bf16 %v922, %v921
      %v980 = vpack.c.bf16 %v924, %v923
      %v981 = vpack.c.bf16 %v926, %v925
      %v982 = vpack.c.bf16 %v928, %v927
      %v983 = vpack.c.bf16 %v930, %v929
      %v984 = vpack.c.bf16 %v932, %v931
      %v985 = vpack.c.bf16 %v934, %v933
      %v986 = vpack.c.bf16 %v936, %v935
      %v987 = vpack.c.bf16 %v938, %v937
      %v988 = vpack.c.bf16 %v940, %v939
      %v989 = vpack.c.bf16 %v942, %v941
      %v990 = vpack.c.bf16 %v944, %v943
      %v991 = vpack.c.bf16 %v946, %v945
      %v992 = vpack.c.bf16 %v948, %v947
      %v993 = vpack.c.bf16 %v950, %v949
      %v994 = vpack.c.bf16 %v952, %v951
      %v995 = vpack.c.bf16 %v954, %v953
      %v996 = vpack.c.bf16 %v956, %v955
      %v997 = vpack.c.bf16 %v958, %v957
      %v998 = vpack.c.bf16 %v960, %v959
      %v999 = vpack.c.bf16 %v962, %v961
      %v1000 = vpack.c.bf16 %v964, %v963
      %v1001 = vpack.c.bf16 %v966, %v965
      %v1002 = vpack.c.bf16 %v968, %v967
      %v1003 = vpack.c.bf16 %v970, %v969
      %v1004 = vpack.c.bf16 %v972, %v971
      %v1005 = vld [vmem:[%s3] sm:$0xf]
      %v1006 = vld [vmem:[%s3 + $0x4] sm:$0xf]
      %v1007 = vld [vmem:[%s3 + $0x8] sm:$0xf]
      %v1008 = vld [vmem:[%s3 + $0xc] sm:$0xf]
      %v1009 = vld [vmem:[%s4] sm:$0x1]
      %v1011 = vlaneseq
      %v1012 = vshrl.u32 %v1011, 7
      %v1013 = vsub.s32 0, %v1012
      %v1014 = vrot.slane %v1009, %v1013
      %v1020 = vunpack.c.l.b16 %v1005
      %v1021 = vunpack.c.l.b16 %v1006
      %v1022 = vunpack.c.l.b16 %v1007
      %v1023 = vunpack.c.l.b16 %v1008
      %v1024 = vpack.c.b16 %v1021, %v1020
      %v1025 = vpack.c.b16 %v1023, %v1022
      %vm1028 = vcmask 261120
      %v1030 = vsel %vm1028, %v973, 0
      %v1033 = vsel %vm1028, %v974, 0
      %v1036 = vsel %vm1028, %v975, 0
      %v1039 = vsel %vm1028, %v976, 0
      %v1042 = vsel %vm1028, %v977, 0
      %v1045 = vsel %vm1028, %v978, 0
      %v1048 = vsel %vm1028, %v979, 0
      %v1051 = vsel %vm1028, %v980, 0
      %v1054 = vsel %vm1028, %v981, 0
      %v1057 = vsel %vm1028, %v982, 0
      %v1060 = vsel %vm1028, %v983, 0
      %v1063 = vsel %vm1028, %v984, 0
      %v1066 = vsel %vm1028, %v985, 0
      %v1069 = vsel %vm1028, %v986, 0
      %v1072 = vsel %vm1028, %v987, 0
      %v1075 = vsel %vm1028, %v988, 0
      %v1078 = vsel %vm1028, %v989, 0
      %v1081 = vsel %vm1028, %v990, 0
      %v1084 = vsel %vm1028, %v991, 0
      %v1087 = vsel %vm1028, %v992, 0
      %v1090 = vsel %vm1028, %v993, 0
      %v1093 = vsel %vm1028, %v994, 0
      %v1096 = vsel %vm1028, %v995, 0
      %v1099 = vsel %vm1028, %v996, 0
      %v1102 = vsel %vm1028, %v997, 0
      %v1105 = vsel %vm1028, %v998, 0
      %v1108 = vsel %vm1028, %v999, 0
      %v1111 = vsel %vm1028, %v1000, 0
      %v1114 = vsel %vm1028, %v1001, 0
      %v1117 = vsel %vm1028, %v1002, 0
      %v1120 = vsel %vm1028, %v1003, 0
      %v1123 = vsel %vm1028, %v1004, 0
      %1125 = vmatprep.subr.bf16.mxu0 0
      %1126 = vmatpush1.bf16.msra.mxu0 %v1024
      %1127 = vmatprep.subr.bf16.mxu0 0
      %1128 = vmatpush1.bf16.msra.mxu0 %v1025
      %1129 = vmatprep.subr.bf16.mxu0 0
      %1130 = vmatpush1.bf16.msra.mxu0 0
      %1131 = vmatprep.subr.bf16.mxu0 0
      %1132 = vmatpush1.bf16.msra.mxu0 0
      %1133 = vmatprep.subr.bf16.mxu0 0
      %1134 = vmatpush1.bf16.msra.mxu0 0
      %1135 = vmatprep.subr.bf16.mxu0 0
      %1136 = vmatpush1.bf16.msra.mxu0 0
      %1137 = vmatprep.subr.bf16.mxu0 0
      %1138 = vmatpush1.bf16.msra.mxu0 0
      %1139 = vmatprep.subr.bf16.mxu0 0
      %1140 = vmatpush1.bf16.msra.mxu0 0
      %1141 = vmatprep.subr.bf16.mxu0 0
      %1142 = vmatpush1.bf16.msra.mxu0 0
      %1143 = vmatprep.subr.bf16.mxu0 0
      %1144 = vmatpush1.bf16.msra.mxu0 0
      %1145 = vmatprep.subr.bf16.mxu0 0
      %1146 = vmatpush1.bf16.msra.mxu0 0
      %1147 = vmatprep.subr.bf16.mxu0 0
      %1148 = vmatpush1.bf16.msra.mxu0 0
      %1149 = vmatprep.subr.bf16.mxu0 0
      %1150 = vmatpush1.bf16.msra.mxu0 0
      %1151 = vmatprep.subr.bf16.mxu0 0
      %1152 = vmatpush1.bf16.msra.mxu0 0
      %1153 = vmatprep.subr.bf16.mxu0 0
      %1154 = vmatpush1.bf16.msra.mxu0 0
      %1155 = vmatprep.subr.bf16.mxu0 0
      %1156 = vmatpush1.bf16.msra.mxu0 0
      %1157 = vmatprep.mubr.bf16.mxu0 0
      %1158 = vmatmul.mubr.bf16.gmra.mrb[0].mxu0 %v1030
      %v1159 = vpop.f32.mrb[0].mxu0
      %v1160 = vadd.f32 %v1014, %v1159
      %v1161 = vpop.f32.mrb[0].mxu0
      %v1162 = vpop.f32.mrb[0].mxu0
      %v1163 = vadd.f32 %v1014, %v1162
      %v1164 = vpop.f32.mrb[0].mxu0
      %1165 = vmatprep.mubr.bf16.mxu0 0
      %1166 = vmatmul.mubr.bf16.gmra.mrb[0].mxu0 %v1033
      %v1167 = vpop.f32.mrb[0].mxu0
      %v1168 = vadd.f32 %v1014, %v1167
      %v1169 = vpop.f32.mrb[0].mxu0
      %v1170 = vpop.f32.mrb[0].mxu0
      %v1171 = vadd.f32 %v1014, %v1170
      %v1172 = vpop.f32.mrb[0].mxu0
      %1173 = vmatprep.mubr.bf16.mxu0 0
      %1174 = vmatmul.mubr.bf16.gmra.mrb[0].mxu0 %v1036
      %v1175 = vpop.f32.mrb[0].mxu0
      %v1176 = vadd.f32 %v1014, %v1175
      %v1177 = vpop.f32.mrb[0].mxu0
      %v1178 = vpop.f32.mrb[0].mxu0
      %v1179 = vadd.f32 %v1014, %v1178
      %v1180 = vpop.f32.mrb[0].mxu0
      %1181 = vmatprep.mubr.bf16.mxu0 0
      %1182 = vmatmul.mubr.bf16.gmra.mrb[0].mxu0 %v1039
      %v1183 = vpop.f32.mrb[0].mxu0
      %v1184 = vadd.f32 %v1014, %v1183
      %v1185 = vpop.f32.mrb[0].mxu0
      %v1186 = vpop.f32.mrb[0].mxu0
      %v1187 = vadd.f32 %v1014, %v1186
      %v1188 = vpop.f32.mrb[0].mxu0
      %1189 = vmatprep.mubr.bf16.mxu0 0
      %1190 = vmatmul.mubr.bf16.gmra.mrb[0].mxu0 %v1042
      %v1191 = vpop.f32.mrb[0].mxu0
      %v1192 = vadd.f32 %v1014, %v1191
      %v1193 = vpop.f32.mrb[0].mxu0
      %v1194 = vpop.f32.mrb[0].mxu0
      %v1195 = vadd.f32 %v1014, %v1194
      %v1196 = vpop.f32.mrb[0].mxu0
      %1197 = vmatprep.mubr.bf16.mxu0 0
      %1198 = vmatmul.mubr.bf16.gmra.mrb[0].mxu0 %v1045
      %v1199 = vpop.f32.mrb[0].mxu0
      %v1200 = vadd.f32 %v1014, %v1199
      %v1201 = vpop.f32.mrb[0].mxu0
      %v1202 = vpop.f32.mrb[0].mxu0
      %v1203 = vadd.f32 %v1014, %v1202
      %v1204 = vpop.f32.mrb[0].mxu0
      %1205 = vmatprep.mubr.bf16.mxu0 0
      %1206 = vmatmul.mubr.bf16.gmra.mrb[0].mxu0 %v1048
      %v1207 = vpop.f32.mrb[0].mxu0
      %v1208 = vadd.f32 %v1014, %v1207
      %v1209 = vpop.f32.mrb[0].mxu0
      %v1210 = vpop.f32.mrb[0].mxu0
      %v1211 = vadd.f32 %v1014, %v1210
      %v1212 = vpop.f32.mrb[0].mxu0
      %1213 = vmatprep.mubr.bf16.mxu0 0
      %1214 = vmatmul.mubr.bf16.gmra.mrb[0].mxu0 %v1051
      %v1215 = vpop.f32.mrb[0].mxu0
      %v1216 = vadd.f32 %v1014, %v1215
      %v1217 = vpop.f32.mrb[0].mxu0
      %v1218 = vpop.f32.mrb[0].mxu0
      %v1219 = vadd.f32 %v1014, %v1218
      %v1220 = vpop.f32.mrb[0].mxu0
      %1221 = vmatprep.mubr.bf16.mxu0 0
      %1222 = vmatmul.mubr.bf16.gmra.mrb[0].mxu0 %v1054
      %v1223 = vpop.f32.mrb[0].mxu0
      %v1224 = vadd.f32 %v1014, %v1223
      %v1225 = vpop.f32.mrb[0].mxu0
      %v1226 = vpop.f32.mrb[0].mxu0
      %v1227 = vadd.f32 %v1014, %v1226
      %v1228 = vpop.f32.mrb[0].mxu0
      %1229 = vmatprep.mubr.bf16.mxu0 0
      %1230 = vmatmul.mubr.bf16.gmra.mrb[0].mxu0 %v1057
      %v1231 = vpop.f32.mrb[0].mxu0
      %v1232 = vadd.f32 %v1014, %v1231
      %v1233 = vpop.f32.mrb[0].mxu0
      %v1234 = vpop.f32.mrb[0].mxu0
      %v1235 = vadd.f32 %v1014, %v1234
      %v1236 = vpop.f32.mrb[0].mxu0
      %1237 = vmatprep.mubr.bf16.mxu0 0
      %1238 = vmatmul.mubr.bf16.gmra.mrb[0].mxu0 %v1060
      %v1239 = vpop.f32.mrb[0].mxu0
      %v1240 = vadd.f32 %v1014, %v1239
      %v1241 = vpop.f32.mrb[0].mxu0
      %v1242 = vpop.f32.mrb[0].mxu0
      %v1243 = vadd.f32 %v1014, %v1242
      %v1244 = vpop.f32.mrb[0].mxu0
      %1245 = vmatprep.mubr.bf16.mxu0 0
      %1246 = vmatmul.mubr.bf16.gmra.mrb[0].mxu0 %v1063
      %v1247 = vpop.f32.mrb[0].mxu0
      %v1248 = vadd.f32 %v1014, %v1247
      %v1249 = vpop.f32.mrb[0].mxu0
      %v1250 = vpop.f32.mrb[0].mxu0
      %v1251 = vadd.f32 %v1014, %v1250
      %v1252 = vpop.f32.mrb[0].mxu0
      %1253 = vmatprep.mubr.bf16.mxu0 0
      %1254 = vmatmul.mubr.bf16.gmra.mrb[0].mxu0 %v1066
      %v1255 = vpop.f32.mrb[0].mxu0
      %v1256 = vadd.f32 %v1014, %v1255
      %v1257 = vpop.f32.mrb[0].mxu0
      %v1258 = vpop.f32.mrb[0].mxu0
      %v1259 = vadd.f32 %v1014, %v1258
      %v1260 = vpop.f32.mrb[0].mxu0
      %1261 = vmatprep.mubr.bf16.mxu0 0
      %1262 = vmatmul.mubr.bf16.gmra.mrb[0].mxu0 %v1069
      %v1263 = vpop.f32.mrb[0].mxu0
      %v1264 = vadd.f32 %v1014, %v1263
      %v1265 = vpop.f32.mrb[0].mxu0
      %v1266 = vpop.f32.mrb[0].mxu0
      %v1267 = vadd.f32 %v1014, %v1266
      %v1268 = vpop.f32.mrb[0].mxu0
      %1269 = vmatprep.mubr.bf16.mxu0 0
      %1270 = vmatmul.mubr.bf16.gmra.mrb[0].mxu0 %v1072
      %v1271 = vpop.f32.mrb[0].mxu0
      %v1272 = vadd.f32 %v1014, %v1271
      %v1273 = vpop.f32.mrb[0].mxu0
      %v1274 = vpop.f32.mrb[0].mxu0
      %v1275 = vadd.f32 %v1014, %v1274
      %v1276 = vpop.f32.mrb[0].mxu0
      %1277 = vmatprep.mubr.bf16.mxu0 0
      %1278 = vmatmul.mubr.bf16.gmra.mrb[0].mxu0 %v1075
      %v1279 = vpop.f32.mrb[0].mxu0
      %v1280 = vadd.f32 %v1014, %v1279
      %v1281 = vpop.f32.mrb[0].mxu0
      %v1282 = vpop.f32.mrb[0].mxu0
      %v1283 = vadd.f32 %v1014, %v1282
      %v1284 = vpop.f32.mrb[0].mxu0
      %1285 = vmatprep.mubr.bf16.mxu0 0
      %1286 = vmatmul.mubr.bf16.gmra.mrb[0].mxu0 %v1078
      %v1287 = vpop.f32.mrb[0].mxu0
      %v1288 = vadd.f32 %v1014, %v1287
      %v1289 = vpop.f32.mrb[0].mxu0
      %v1290 = vpop.f32.mrb[0].mxu0
      %v1291 = vadd.f32 %v1014, %v1290
      %v1292 = vpop.f32.mrb[0].mxu0
      %1293 = vmatprep.mubr.bf16.mxu0 0
      %1294 = vmatmul.mubr.bf16.gmra.mrb[0].mxu0 %v1081
      %v1295 = vpop.f32.mrb[0].mxu0
      %v1296 = vadd.f32 %v1014, %v1295
      %v1297 = vpop.f32.mrb[0].mxu0
      %v1298 = vpop.f32.mrb[0].mxu0
      %v1299 = vadd.f32 %v1014, %v1298
      %v1300 = vpop.f32.mrb[0].mxu0
      %1301 = vmatprep.mubr.bf16.mxu0 0
      %1302 = vmatmul.mubr.bf16.gmra.mrb[0].mxu0 %v1084
      %v1303 = vpop.f32.mrb[0].mxu0
      %v1304 = vadd.f32 %v1014, %v1303
      %v1305 = vpop.f32.mrb[0].mxu0
      %v1306 = vpop.f32.mrb[0].mxu0
      %v1307 = vadd.f32 %v1014, %v1306
      %v1308 = vpop.f32.mrb[0].mxu0
      %1309 = vmatprep.mubr.bf16.mxu0 0
      %1310 = vmatmul.mubr.bf16.gmra.mrb[0].mxu0 %v1087
      %v1311 = vpop.f32.mrb[0].mxu0
      %v1312 = vadd.f32 %v1014, %v1311
      %v1313 = vpop.f32.mrb[0].mxu0
      %v1314 = vpop.f32.mrb[0].mxu0
      %v1315 = vadd.f32 %v1014, %v1314
      %v1316 = vpop.f32.mrb[0].mxu0
      %1317 = vmatprep.mubr.bf16.mxu0 0
      %1318 = vmatmul.mubr.bf16.gmra.mrb[0].mxu0 %v1090
      %v1319 = vpop.f32.mrb[0].mxu0
      %v1320 = vadd.f32 %v1014, %v1319
      %v1321 = vpop.f32.mrb[0].mxu0
      %v1322 = vpop.f32.mrb[0].mxu0
      %v1323 = vadd.f32 %v1014, %v1322
      %v1324 = vpop.f32.mrb[0].mxu0
      %1325 = vmatprep.mubr.bf16.mxu0 0
      %1326 = vmatmul.mubr.bf16.gmra.mrb[0].mxu0 %v1093
      %v1327 = vpop.f32.mrb[0].mxu0
      %v1328 = vadd.f32 %v1014, %v1327
      %v1329 = vpop.f32.mrb[0].mxu0
      %v1330 = vpop.f32.mrb[0].mxu0
      %v1331 = vadd.f32 %v1014, %v1330
      %v1332 = vpop.f32.mrb[0].mxu0
      %1333 = vmatprep.mubr.bf16.mxu0 0
      %1334 = vmatmul.mubr.bf16.gmra.mrb[0].mxu0 %v1096
      %v1335 = vpop.f32.mrb[0].mxu0
      %v1336 = vadd.f32 %v1014, %v1335
      %v1337 = vpop.f32.mrb[0].mxu0
      %v1338 = vpop.f32.mrb[0].mxu0
      %v1339 = vadd.f32 %v1014, %v1338
      %v1340 = vpop.f32.mrb[0].mxu0
      %1341 = vmatprep.mubr.bf16.mxu0 0
      %1342 = vmatmul.mubr.bf16.gmra.mrb[0].mxu0 %v1099
      %v1343 = vpop.f32.mrb[0].mxu0
      %v1344 = vadd.f32 %v1014, %v1343
      %v1345 = vpop.f32.mrb[0].mxu0
      %v1346 = vpop.f32.mrb[0].mxu0
      %v1347 = vadd.f32 %v1014, %v1346
      %v1348 = vpop.f32.mrb[0].mxu0
      %1349 = vmatprep.mubr.bf16.mxu0 0
      %1350 = vmatmul.mubr.bf16.gmra.mrb[0].mxu0 %v1102
      %v1351 = vpop.f32.mrb[0].mxu0
      %v1352 = vadd.f32 %v1014, %v1351
      %v1353 = vpop.f32.mrb[0].mxu0
      %v1354 = vpop.f32.mrb[0].mxu0
      %v1355 = vadd.f32 %v1014, %v1354
      %v1356 = vpop.f32.mrb[0].mxu0
      %1357 = vmatprep.mubr.bf16.mxu0 0
      %1358 = vmatmul.mubr.bf16.gmra.mrb[0].mxu0 %v1105
      %v1359 = vpop.f32.mrb[0].mxu0
      %v1360 = vadd.f32 %v1014, %v1359
      %v1361 = vpop.f32.mrb[0].mxu0
      %v1362 = vpop.f32.mrb[0].mxu0
      %v1363 = vadd.f32 %v1014, %v1362
      %v1364 = vpop.f32.mrb[0].mxu0
      %1365 = vmatprep.mubr.bf16.mxu0 0
      %1366 = vmatmul.mubr.bf16.gmra.mrb[0].mxu0 %v1108
      %v1367 = vpop.f32.mrb[0].mxu0
      %v1368 = vadd.f32 %v1014, %v1367
      %v1369 = vpop.f32.mrb[0].mxu0
      %v1370 = vpop.f32.mrb[0].mxu0
      %v1371 = vadd.f32 %v1014, %v1370
      %v1372 = vpop.f32.mrb[0].mxu0
      %1373 = vmatprep.mubr.bf16.mxu0 0
      %1374 = vmatmul.mubr.bf16.gmra.mrb[0].mxu0 %v1111
      %v1375 = vpop.f32.mrb[0].mxu0
      %v1376 = vadd.f32 %v1014, %v1375
      %v1377 = vpop.f32.mrb[0].mxu0
      %v1378 = vpop.f32.mrb[0].mxu0
      %v1379 = vadd.f32 %v1014, %v1378
      %v1380 = vpop.f32.mrb[0].mxu0
      %1381 = vmatprep.mubr.bf16.mxu0 0
      %1382 = vmatmul.mubr.bf16.gmra.mrb[0].mxu0 %v1114
      %v1383 = vpop.f32.mrb[0].mxu0
      %v1384 = vadd.f32 %v1014, %v1383
      %v1385 = vpop.f32.mrb[0].mxu0
      %v1386 = vpop.f32.mrb[0].mxu0
      %v1387 = vadd.f32 %v1014, %v1386
      %v1388 = vpop.f32.mrb[0].mxu0
      %1389 = vmatprep.mubr.bf16.mxu0 0
      %1390 = vmatmul.mubr.bf16.gmra.mrb[0].mxu0 %v1117
      %v1391 = vpop.f32.mrb[0].mxu0
      %v1392 = vadd.f32 %v1014, %v1391
      %v1393 = vpop.f32.mrb[0].mxu0
      %v1394 = vpop.f32.mrb[0].mxu0
      %v1395 = vadd.f32 %v1014, %v1394
      %v1396 = vpop.f32.mrb[0].mxu0
      %1397 = vmatprep.mubr.bf16.mxu0 0
      %1398 = vmatmul.mubr.bf16.gmra.mrb[0].mxu0 %v1120
      %v1399 = vpop.f32.mrb[0].mxu0
      %v1400 = vadd.f32 %v1014, %v1399
      %v1401 = vpop.f32.mrb[0].mxu0
      %v1402 = vpop.f32.mrb[0].mxu0
      %v1403 = vadd.f32 %v1014, %v1402
      %v1404 = vpop.f32.mrb[0].mxu0
      %1405 = vmatprep.mubr.bf16.mxu0 0
      %1406 = vmatmul.mubr.bf16.gmra.mrb[0].mxu0 %v1123
      %v1407 = vpop.f32.mrb[0].mxu0
      %v1408 = vadd.f32 %v1014, %v1407
      %v1409 = vpop.f32.mrb[0].mxu0
      %v1410 = vpop.f32.mrb[0].mxu0
      %v1411 = vadd.f32 %v1014, %v1410
      %v1412 = vpop.f32.mrb[0].mxu0
      %1413 = vdwg.mxu0
      %vm1414 = vcmp.ge.f32.partialorder %v1160, 0.0
      %vm1415 = vcmp.ge.f32.partialorder %v1163, 0.0
      %vm1416 = vcmp.ge.f32.partialorder %v1168, 0.0
      %vm1417 = vcmp.ge.f32.partialorder %v1171, 0.0
      %vm1418 = vcmp.ge.f32.partialorder %v1176, 0.0
      %vm1419 = vcmp.ge.f32.partialorder %v1179, 0.0
      %vm1420 = vcmp.ge.f32.partialorder %v1184, 0.0
      %vm1421 = vcmp.ge.f32.partialorder %v1187, 0.0
      %vm1422 = vcmp.ge.f32.partialorder %v1192, 0.0
      %vm1423 = vcmp.ge.f32.partialorder %v1195, 0.0
      %vm1424 = vcmp.ge.f32.partialorder %v1200, 0.0
      %vm1425 = vcmp.ge.f32.partialorder %v1203, 0.0
      %vm1426 = vcmp.ge.f32.partialorder %v1208, 0.0
      %vm1427 = vcmp.ge.f32.partialorder %v1211, 0.0
      %vm1428 = vcmp.ge.f32.partialorder %v1216, 0.0
      %vm1429 = vcmp.ge.f32.partialorder %v1219, 0.0
      %vm1430 = vcmp.ge.f32.partialorder %v1224, 0.0
      %vm1431 = vcmp.ge.f32.partialorder %v1227, 0.0
      %vm1432 = vcmp.ge.f32.partialorder %v1232, 0.0
      %vm1433 = vcmp.ge.f32.partialorder %v1235, 0.0
      %vm1434 = vcmp.ge.f32.partialorder %v1240, 0.0
      %vm1435 = vcmp.ge.f32.partialorder %v1243, 0.0
      %vm1436 = vcmp.ge.f32.partialorder %v1248, 0.0
      %vm1437 = vcmp.ge.f32.partialorder %v1251, 0.0
      %vm1438 = vcmp.ge.f32.partialorder %v1256, 0.0
      %vm1439 = vcmp.ge.f32.partialorder %v1259, 0.0
      %vm1440 = vcmp.ge.f32.partialorder %v1264, 0.0
      %vm1441 = vcmp.ge.f32.partialorder %v1267, 0.0
      %vm1442 = vcmp.ge.f32.partialorder %v1272, 0.0
      %vm1443 = vcmp.ge.f32.partialorder %v1275, 0.0
      %vm1444 = vcmp.ge.f32.partialorder %v1280, 0.0
      %vm1445 = vcmp.ge.f32.partialorder %v1283, 0.0
      %vm1446 = vcmp.ge.f32.partialorder %v1288, 0.0
      %vm1447 = vcmp.ge.f32.partialorder %v1291, 0.0
      %vm1448 = vcmp.ge.f32.partialorder %v1296, 0.0
      %vm1449 = vcmp.ge.f32.partialorder %v1299, 0.0
      %vm1450 = vcmp.ge.f32.partialorder %v1304, 0.0
      %vm1451 = vcmp.ge.f32.partialorder %v1307, 0.0
      %vm1452 = vcmp.ge.f32.partialorder %v1312, 0.0
      %vm1453 = vcmp.ge.f32.partialorder %v1315, 0.0
      %vm1454 = vcmp.ge.f32.partialorder %v1320, 0.0
      %vm1455 = vcmp.ge.f32.partialorder %v1323, 0.0
      %vm1456 = vcmp.ge.f32.partialorder %v1328, 0.0
      %vm1457 = vcmp.ge.f32.partialorder %v1331, 0.0
      %vm1458 = vcmp.ge.f32.partialorder %v1336, 0.0
      %vm1459 = vcmp.ge.f32.partialorder %v1339, 0.0
      %vm1460 = vcmp.ge.f32.partialorder %v1344, 0.0
      %vm1461 = vcmp.ge.f32.partialorder %v1347, 0.0
      %vm1462 = vcmp.ge.f32.partialorder %v1352, 0.0
      %vm1463 = vcmp.ge.f32.partialorder %v1355, 0.0
      %vm1464 = vcmp.ge.f32.partialorder %v1360, 0.0
      %vm1465 = vcmp.ge.f32.partialorder %v1363, 0.0
      %vm1466 = vcmp.ge.f32.partialorder %v1368, 0.0
      %vm1467 = vcmp.ge.f32.partialorder %v1371, 0.0
      %vm1468 = vcmp.ge.f32.partialorder %v1376, 0.0
      %vm1469 = vcmp.ge.f32.partialorder %v1379, 0.0
      %vm1470 = vcmp.ge.f32.partialorder %v1384, 0.0
      %vm1471 = vcmp.ge.f32.partialorder %v1387, 0.0
      %vm1472 = vcmp.ge.f32.partialorder %v1392, 0.0
      %vm1473 = vcmp.ge.f32.partialorder %v1395, 0.0
      %vm1474 = vcmp.ge.f32.partialorder %v1400, 0.0
      %vm1475 = vcmp.ge.f32.partialorder %v1403, 0.0
      %vm1476 = vcmp.ge.f32.partialorder %v1408, 0.0
      %vm1477 = vcmp.ge.f32.partialorder %v1411, 0.0
      %v1478 = vmul.f32 %v1160, 0.22916667
      %v1479 = vmul.f32 %v1163, 0.22916667
      %v1480 = vmul.f32 %v1168, 0.22916667
      %v1481 = vmul.f32 %v1171, 0.22916667
      %v1482 = vmul.f32 %v1176, 0.22916667
      %v1483 = vmul.f32 %v1179, 0.22916667
      %v1484 = vmul.f32 %v1184, 0.22916667
      %v1485 = vmul.f32 %v1187, 0.22916667
      %v1486 = vmul.f32 %v1192, 0.22916667
      %v1487 = vmul.f32 %v1195, 0.22916667
      %v1488 = vmul.f32 %v1200, 0.22916667
      %v1489 = vmul.f32 %v1203, 0.22916667
      %v1490 = vmul.f32 %v1208, 0.22916667
      %v1491 = vmul.f32 %v1211, 0.22916667
      %v1492 = vmul.f32 %v1216, 0.22916667
      %v1493 = vmul.f32 %v1219, 0.22916667
      %v1494 = vmul.f32 %v1224, 0.22916667
      %v1495 = vmul.f32 %v1227, 0.22916667
      %v1496 = vmul.f32 %v1232, 0.22916667
      %v1497 = vmul.f32 %v1235, 0.22916667
      %v1498 = vmul.f32 %v1240, 0.22916667
      %v1499 = vmul.f32 %v1243, 0.22916667
      %v1500 = vmul.f32 %v1248, 0.22916667
      %v1501 = vmul.f32 %v1251, 0.22916667
      %v1502 = vmul.f32 %v1256, 0.22916667
      %v1503 = vmul.f32 %v1259, 0.22916667
      %v1504 = vmul.f32 %v1264, 0.22916667
      %v1505 = vmul.f32 %v1267, 0.22916667
      %v1506 = vmul.f32 %v1272, 0.22916667
      %v1507 = vmul.f32 %v1275, 0.22916667
      %v1508 = vmul.f32 %v1280, 0.22916667
      %v1509 = vmul.f32 %v1283, 0.22916667
      %v1510 = vmul.f32 %v1288, 0.22916667
      %v1511 = vmul.f32 %v1291, 0.22916667
      %v1512 = vmul.f32 %v1296, 0.22916667
      %v1513 = vmul.f32 %v1299, 0.22916667
      %v1514 = vmul.f32 %v1304, 0.22916667
      %v1515 = vmul.f32 %v1307, 0.22916667
      %v1516 = vmul.f32 %v1312, 0.22916667
      %v1517 = vmul.f32 %v1315, 0.22916667
      %v1518 = vmul.f32 %v1320, 0.22916667
      %v1519 = vmul.f32 %v1323, 0.22916667
      %v1520 = vmul.f32 %v1328, 0.22916667
      %v1521 = vmul.f32 %v1331, 0.22916667
      %v1522 = vmul.f32 %v1336, 0.22916667
      %v1523 = vmul.f32 %v1339, 0.22916667
      %v1524 = vmul.f32 %v1344, 0.22916667
      %v1525 = vmul.f32 %v1347, 0.22916667
      %v1526 = vmul.f32 %v1352, 0.22916667
      %v1527 = vmul.f32 %v1355, 0.22916667
      %v1528 = vmul.f32 %v1360, 0.22916667
      %v1529 = vmul.f32 %v1363, 0.22916667
      %v1530 = vmul.f32 %v1368, 0.22916667
      %v1531 = vmul.f32 %v1371, 0.22916667
      %v1532 = vmul.f32 %v1376, 0.22916667
      %v1533 = vmul.f32 %v1379, 0.22916667
      %v1534 = vmul.f32 %v1384, 0.22916667
      %v1535 = vmul.f32 %v1387, 0.22916667
      %v1536 = vmul.f32 %v1392, 0.22916667
      %v1537 = vmul.f32 %v1395, 0.22916667
      %v1538 = vmul.f32 %v1400, 0.22916667
      %v1539 = vmul.f32 %v1403, 0.22916667
      %v1540 = vmul.f32 %v1408, 0.22916667
      %v1541 = vmul.f32 %v1411, 0.22916667
      %v1542 = vsel %vm1414, %v1160, %v1478
      %v1543 = vsel %vm1415, %v1163, %v1479
      %v1544 = vsel %vm1416, %v1168, %v1480
      %v1545 = vsel %vm1417, %v1171, %v1481
      %v1546 = vsel %vm1418, %v1176, %v1482
      %v1547 = vsel %vm1419, %v1179, %v1483
      %v1548 = vsel %vm1420, %v1184, %v1484
      %v1549 = vsel %vm1421, %v1187, %v1485
      %v1550 = vsel %vm1422, %v1192, %v1486
      %v1551 = vsel %vm1423, %v1195, %v1487
      %v1552 = vsel %vm1424, %v1200, %v1488
      %v1553 = vsel %vm1425, %v1203, %v1489
      %v1554 = vsel %vm1426, %v1208, %v1490
      %v1555 = vsel %vm1427, %v1211, %v1491
      %v1556 = vsel %vm1428, %v1216, %v1492
      %v1557 = vsel %vm1429, %v1219, %v1493
      %v1558 = vsel %vm1430, %v1224, %v1494
      %v1559 = vsel %vm1431, %v1227, %v1495
      %v1560 = vsel %vm1432, %v1232, %v1496
      %v1561 = vsel %vm1433, %v1235, %v1497
      %v1562 = vsel %vm1434, %v1240, %v1498
      %v1563 = vsel %vm1435, %v1243, %v1499
      %v1564 = vsel %vm1436, %v1248, %v1500
      %v1565 = vsel %vm1437, %v1251, %v1501
      %v1566 = vsel %vm1438, %v1256, %v1502
      %v1567 = vsel %vm1439, %v1259, %v1503
      %v1568 = vsel %vm1440, %v1264, %v1504
      %v1569 = vsel %vm1441, %v1267, %v1505
      %v1570 = vsel %vm1442, %v1272, %v1506
      %v1571 = vsel %vm1443, %v1275, %v1507
      %v1572 = vsel %vm1444, %v1280, %v1508
      %v1573 = vsel %vm1445, %v1283, %v1509
      %v1574 = vsel %vm1446, %v1288, %v1510
      %v1575 = vsel %vm1447, %v1291, %v1511
      %v1576 = vsel %vm1448, %v1296, %v1512
      %v1577 = vsel %vm1449, %v1299, %v1513
      %v1578 = vsel %vm1450, %v1304, %v1514
      %v1579 = vsel %vm1451, %v1307, %v1515
      %v1580 = vsel %vm1452, %v1312, %v1516
      %v1581 = vsel %vm1453, %v1315, %v1517
      %v1582 = vsel %vm1454, %v1320, %v1518
      %v1583 = vsel %vm1455, %v1323, %v1519
      %v1584 = vsel %vm1456, %v1328, %v1520
      %v1585 = vsel %vm1457, %v1331, %v1521
      %v1586 = vsel %vm1458, %v1336, %v1522
      %v1587 = vsel %vm1459, %v1339, %v1523
      %v1588 = vsel %vm1460, %v1344, %v1524
      %v1589 = vsel %vm1461, %v1347, %v1525
      %v1590 = vsel %vm1462, %v1352, %v1526
      %v1591 = vsel %vm1463, %v1355, %v1527
      %v1592 = vsel %vm1464, %v1360, %v1528
      %v1593 = vsel %vm1465, %v1363, %v1529
      %v1594 = vsel %vm1466, %v1368, %v1530
      %v1595 = vsel %vm1467, %v1371, %v1531
      %v1596 = vsel %vm1468, %v1376, %v1532
      %v1597 = vsel %vm1469, %v1379, %v1533
      %v1598 = vsel %vm1470, %v1384, %v1534
      %v1599 = vsel %vm1471, %v1387, %v1535
      %v1600 = vsel %vm1472, %v1392, %v1536
      %v1601 = vsel %vm1473, %v1395, %v1537
      %v1602 = vsel %vm1474, %v1400, %v1538
      %v1603 = vsel %vm1475, %v1403, %v1539
      %v1604 = vsel %vm1476, %v1408, %v1540
      %v1605 = vsel %vm1477, %v1411, %v1541
      %v1606 = vld [vmem:[%s5] sm:$0x1]
      %v1608 = vlaneseq
      %v1609 = vshrl.u32 %v1608, 7
      %v1610 = vsub.s32 0, %v1609
      %v1611 = vrot.slane %v1606, %v1610
      %v1613 = vmul.f32 %v1542, %v1611
      %v1614 = vmul.f32 %v1543, %v1611
      %v1615 = vmul.f32 %v1544, %v1611
      %v1616 = vmul.f32 %v1545, %v1611
      %v1617 = vmul.f32 %v1546, %v1611
      %v1618 = vmul.f32 %v1547, %v1611
      %v1619 = vmul.f32 %v1548, %v1611
      %v1620 = vmul.f32 %v1549, %v1611
      %v1621 = vmul.f32 %v1550, %v1611
      %v1622 = vmul.f32 %v1551, %v1611
      %v1623 = vmul.f32 %v1552, %v1611
      %v1624 = vmul.f32 %v1553, %v1611
      %v1625 = vmul.f32 %v1554, %v1611
      %v1626 = vmul.f32 %v1555, %v1611
      %v1627 = vmul.f32 %v1556, %v1611
      %v1628 = vmul.f32 %v1557, %v1611
      %v1629 = vmul.f32 %v1558, %v1611
      %v1630 = vmul.f32 %v1559, %v1611
      %v1631 = vmul.f32 %v1560, %v1611
      %v1632 = vmul.f32 %v1561, %v1611
      %v1633 = vmul.f32 %v1562, %v1611
      %v1634 = vmul.f32 %v1563, %v1611
      %v1635 = vmul.f32 %v1564, %v1611
      %v1636 = vmul.f32 %v1565, %v1611
      %v1637 = vmul.f32 %v1566, %v1611
      %v1638 = vmul.f32 %v1567, %v1611
      %v1639 = vmul.f32 %v1568, %v1611
      %v1640 = vmul.f32 %v1569, %v1611
      %v1641 = vmul.f32 %v1570, %v1611
      %v1642 = vmul.f32 %v1571, %v1611
      %v1643 = vmul.f32 %v1572, %v1611
      %v1644 = vmul.f32 %v1573, %v1611
      %v1645 = vmul.f32 %v1574, %v1611
      %v1646 = vmul.f32 %v1575, %v1611
      %v1647 = vmul.f32 %v1576, %v1611
      %v1648 = vmul.f32 %v1577, %v1611
      %v1649 = vmul.f32 %v1578, %v1611
      %v1650 = vmul.f32 %v1579, %v1611
      %v1651 = vmul.f32 %v1580, %v1611
      %v1652 = vmul.f32 %v1581, %v1611
      %v1653 = vmul.f32 %v1582, %v1611
      %v1654 = vmul.f32 %v1583, %v1611
      %v1655 = vmul.f32 %v1584, %v1611
      %v1656 = vmul.f32 %v1585, %v1611
      %v1657 = vmul.f32 %v1586, %v1611
      %v1658 = vmul.f32 %v1587, %v1611
      %v1659 = vmul.f32 %v1588, %v1611
      %v1660 = vmul.f32 %v1589, %v1611
      %v1661 = vmul.f32 %v1590, %v1611
      %v1662 = vmul.f32 %v1591, %v1611
      %v1663 = vmul.f32 %v1592, %v1611
      %v1664 = vmul.f32 %v1593, %v1611
      %v1665 = vmul.f32 %v1594, %v1611
      %v1666 = vmul.f32 %v1595, %v1611
      %v1667 = vmul.f32 %v1596, %v1611
      %v1668 = vmul.f32 %v1597, %v1611
      %v1669 = vmul.f32 %v1598, %v1611
      %v1670 = vmul.f32 %v1599, %v1611
      %v1671 = vmul.f32 %v1600, %v1611
      %v1672 = vmul.f32 %v1601, %v1611
      %v1673 = vmul.f32 %v1602, %v1611
      %v1674 = vmul.f32 %v1603, %v1611
      %v1675 = vmul.f32 %v1604, %v1611
      %v1676 = vmul.f32 %v1605, %v1611
      %vm1677 = vcmask 523264
      %v1678 = vsel %vm1677, %v1613, 0.0
      %1679 = vadd.xlane.f32.xlu0 %v1678
      %v1680 = vpop.xlane.xlu0 %1679
      %v1681 = vsel %vm1677, %v1614, 0.0
      %1682 = vadd.xlane.f32.xlu0 %v1681
      %v1683 = vpop.xlane.xlu0 %1682
      %v1684 = vsel %vm1677, %v1615, 0.0
      %1685 = vadd.xlane.f32.xlu0 %v1684
      %v1686 = vpop.xlane.xlu0 %1685
      %v1687 = vsel %vm1677, %v1616, 0.0
      %1688 = vadd.xlane.f32.xlu0 %v1687
      %v1689 = vpop.xlane.xlu0 %1688
      %v1690 = vsel %vm1677, %v1617, 0.0
      %1691 = vadd.xlane.f32.xlu0 %v1690
      %v1692 = vpop.xlane.xlu0 %1691
      %v1693 = vsel %vm1677, %v1618, 0.0
      %1694 = vadd.xlane.f32.xlu0 %v1693
      %v1695 = vpop.xlane.xlu0 %1694
      %v1696 = vsel %vm1677, %v1619, 0.0
      %1697 = vadd.xlane.f32.xlu0 %v1696
      %v1698 = vpop.xlane.xlu0 %1697
      %v1699 = vsel %vm1677, %v1620, 0.0
      %1700 = vadd.xlane.f32.xlu0 %v1699
      %v1701 = vpop.xlane.xlu0 %1700
      %v1702 = vsel %vm1677, %v1621, 0.0
      %1703 = vadd.xlane.f32.xlu0 %v1702
      %v1704 = vpop.xlane.xlu0 %1703
      %v1705 = vsel %vm1677, %v1622, 0.0
      %1706 = vadd.xlane.f32.xlu0 %v1705
      %v1707 = vpop.xlane.xlu0 %1706
      %v1708 = vsel %vm1677, %v1623, 0.0
      %1709 = vadd.xlane.f32.xlu0 %v1708
      %v1710 = vpop.xlane.xlu0 %1709
      %v1711 = vsel %vm1677, %v1624, 0.0
      %1712 = vadd.xlane.f32.xlu0 %v1711
      %v1713 = vpop.xlane.xlu0 %1712
      %v1714 = vsel %vm1677, %v1625, 0.0
      %1715 = vadd.xlane.f32.xlu0 %v1714
      %v1716 = vpop.xlane.xlu0 %1715
      %v1717 = vsel %vm1677, %v1626, 0.0
      %1718 = vadd.xlane.f32.xlu0 %v1717
      %v1719 = vpop.xlane.xlu0 %1718
      %v1720 = vsel %vm1677, %v1627, 0.0
      %1721 = vadd.xlane.f32.xlu0 %v1720
      %v1722 = vpop.xlane.xlu0 %1721
      %v1723 = vsel %vm1677, %v1628, 0.0
      %1724 = vadd.xlane.f32.xlu0 %v1723
      %v1725 = vpop.xlane.xlu0 %1724
      %v1726 = vsel %vm1677, %v1629, 0.0
      %1727 = vadd.xlane.f32.xlu0 %v1726
      %v1728 = vpop.xlane.xlu0 %1727
      %v1729 = vsel %vm1677, %v1630, 0.0
      %1730 = vadd.xlane.f32.xlu0 %v1729
      %v1731 = vpop.xlane.xlu0 %1730
      %v1732 = vsel %vm1677, %v1631, 0.0
      %1733 = vadd.xlane.f32.xlu0 %v1732
      %v1734 = vpop.xlane.xlu0 %1733
      %v1735 = vsel %vm1677, %v1632, 0.0
      %1736 = vadd.xlane.f32.xlu0 %v1735
      %v1737 = vpop.xlane.xlu0 %1736
      %v1738 = vsel %vm1677, %v1633, 0.0
      %1739 = vadd.xlane.f32.xlu0 %v1738
      %v1740 = vpop.xlane.xlu0 %1739
      %v1741 = vsel %vm1677, %v1634, 0.0
      %1742 = vadd.xlane.f32.xlu0 %v1741
      %v1743 = vpop.xlane.xlu0 %1742
      %v1744 = vsel %vm1677, %v1635, 0.0
      %1745 = vadd.xlane.f32.xlu0 %v1744
      %v1746 = vpop.xlane.xlu0 %1745
      %v1747 = vsel %vm1677, %v1636, 0.0
      %1748 = vadd.xlane.f32.xlu0 %v1747
      %v1749 = vpop.xlane.xlu0 %1748
      %v1750 = vsel %vm1677, %v1637, 0.0
      %1751 = vadd.xlane.f32.xlu0 %v1750
      %v1752 = vpop.xlane.xlu0 %1751
      %v1753 = vsel %vm1677, %v1638, 0.0
      %1754 = vadd.xlane.f32.xlu0 %v1753
      %v1755 = vpop.xlane.xlu0 %1754
      %v1756 = vsel %vm1677, %v1639, 0.0
      %1757 = vadd.xlane.f32.xlu0 %v1756
      %v1758 = vpop.xlane.xlu0 %1757
      %v1759 = vsel %vm1677, %v1640, 0.0
      %1760 = vadd.xlane.f32.xlu0 %v1759
      %v1761 = vpop.xlane.xlu0 %1760
      %v1762 = vsel %vm1677, %v1641, 0.0
      %1763 = vadd.xlane.f32.xlu0 %v1762
      %v1764 = vpop.xlane.xlu0 %1763
      %v1765 = vsel %vm1677, %v1642, 0.0
      %1766 = vadd.xlane.f32.xlu0 %v1765
      %v1767 = vpop.xlane.xlu0 %1766
      %v1768 = vsel %vm1677, %v1643, 0.0
      %1769 = vadd.xlane.f32.xlu0 %v1768
      %v1770 = vpop.xlane.xlu0 %1769
      %v1771 = vsel %vm1677, %v1644, 0.0
      %1772 = vadd.xlane.f32.xlu0 %v1771
      %v1773 = vpop.xlane.xlu0 %1772
      %v1774 = vsel %vm1677, %v1645, 0.0
      %1775 = vadd.xlane.f32.xlu0 %v1774
      %v1776 = vpop.xlane.xlu0 %1775
      %v1777 = vsel %vm1677, %v1646, 0.0
      %1778 = vadd.xlane.f32.xlu0 %v1777
      %v1779 = vpop.xlane.xlu0 %1778
      %v1780 = vsel %vm1677, %v1647, 0.0
      %1781 = vadd.xlane.f32.xlu0 %v1780
      %v1782 = vpop.xlane.xlu0 %1781
      %v1783 = vsel %vm1677, %v1648, 0.0
      %1784 = vadd.xlane.f32.xlu0 %v1783
      %v1785 = vpop.xlane.xlu0 %1784
      %v1786 = vsel %vm1677, %v1649, 0.0
      %1787 = vadd.xlane.f32.xlu0 %v1786
      %v1788 = vpop.xlane.xlu0 %1787
      %v1789 = vsel %vm1677, %v1650, 0.0
      %1790 = vadd.xlane.f32.xlu0 %v1789
      %v1791 = vpop.xlane.xlu0 %1790
      %v1792 = vsel %vm1677, %v1651, 0.0
      %1793 = vadd.xlane.f32.xlu0 %v1792
      %v1794 = vpop.xlane.xlu0 %1793
      %v1795 = vsel %vm1677, %v1652, 0.0
      %1796 = vadd.xlane.f32.xlu0 %v1795
      %v1797 = vpop.xlane.xlu0 %1796
      %v1798 = vsel %vm1677, %v1653, 0.0
      %1799 = vadd.xlane.f32.xlu0 %v1798
      %v1800 = vpop.xlane.xlu0 %1799
      %v1801 = vsel %vm1677, %v1654, 0.0
      %1802 = vadd.xlane.f32.xlu0 %v1801
      %v1803 = vpop.xlane.xlu0 %1802
      %v1804 = vsel %vm1677, %v1655, 0.0
      %1805 = vadd.xlane.f32.xlu0 %v1804
      %v1806 = vpop.xlane.xlu0 %1805
      %v1807 = vsel %vm1677, %v1656, 0.0
      %1808 = vadd.xlane.f32.xlu0 %v1807
      %v1809 = vpop.xlane.xlu0 %1808
      %v1810 = vsel %vm1677, %v1657, 0.0
      %1811 = vadd.xlane.f32.xlu0 %v1810
      %v1812 = vpop.xlane.xlu0 %1811
      %v1813 = vsel %vm1677, %v1658, 0.0
      %1814 = vadd.xlane.f32.xlu0 %v1813
      %v1815 = vpop.xlane.xlu0 %1814
      %v1816 = vsel %vm1677, %v1659, 0.0
      %1817 = vadd.xlane.f32.xlu0 %v1816
      %v1818 = vpop.xlane.xlu0 %1817
      %v1819 = vsel %vm1677, %v1660, 0.0
      %1820 = vadd.xlane.f32.xlu0 %v1819
      %v1821 = vpop.xlane.xlu0 %1820
      %v1822 = vsel %vm1677, %v1661, 0.0
      %1823 = vadd.xlane.f32.xlu0 %v1822
      %v1824 = vpop.xlane.xlu0 %1823
      %v1825 = vsel %vm1677, %v1662, 0.0
      %1826 = vadd.xlane.f32.xlu0 %v1825
      %v1827 = vpop.xlane.xlu0 %1826
      %v1828 = vsel %vm1677, %v1663, 0.0
      %1829 = vadd.xlane.f32.xlu0 %v1828
      %v1830 = vpop.xlane.xlu0 %1829
      %v1831 = vsel %vm1677, %v1664, 0.0
      %1832 = vadd.xlane.f32.xlu0 %v1831
      %v1833 = vpop.xlane.xlu0 %1832
      %v1834 = vsel %vm1677, %v1665, 0.0
      %1835 = vadd.xlane.f32.xlu0 %v1834
      %v1836 = vpop.xlane.xlu0 %1835
      %v1837 = vsel %vm1677, %v1666, 0.0
      %1838 = vadd.xlane.f32.xlu0 %v1837
      %v1839 = vpop.xlane.xlu0 %1838
      %v1840 = vsel %vm1677, %v1667, 0.0
      %1841 = vadd.xlane.f32.xlu0 %v1840
      %v1842 = vpop.xlane.xlu0 %1841
      %v1843 = vsel %vm1677, %v1668, 0.0
      %1844 = vadd.xlane.f32.xlu0 %v1843
      %v1845 = vpop.xlane.xlu0 %1844
      %v1846 = vsel %vm1677, %v1669, 0.0
      %1847 = vadd.xlane.f32.xlu0 %v1846
      %v1848 = vpop.xlane.xlu0 %1847
      %v1849 = vsel %vm1677, %v1670, 0.0
      %1850 = vadd.xlane.f32.xlu0 %v1849
      %v1851 = vpop.xlane.xlu0 %1850
      %v1852 = vsel %vm1677, %v1671, 0.0
      %1853 = vadd.xlane.f32.xlu0 %v1852
      %v1854 = vpop.xlane.xlu0 %1853
      %v1855 = vsel %vm1677, %v1672, 0.0
      %1856 = vadd.xlane.f32.xlu0 %v1855
      %v1857 = vpop.xlane.xlu0 %1856
      %v1858 = vsel %vm1677, %v1673, 0.0
      %1859 = vadd.xlane.f32.xlu0 %v1858
      %v1860 = vpop.xlane.xlu0 %1859
      %v1861 = vsel %vm1677, %v1674, 0.0
      %1862 = vadd.xlane.f32.xlu0 %v1861
      %v1863 = vpop.xlane.xlu0 %1862
      %v1864 = vsel %vm1677, %v1675, 0.0
      %1865 = vadd.xlane.f32.xlu0 %v1864
      %v1866 = vpop.xlane.xlu0 %1865
      %v1867 = vsel %vm1677, %v1676, 0.0
      %1868 = vadd.xlane.f32.xlu0 %v1867
      %v1869 = vpop.xlane.xlu0 %1868
      %s1870 = sld [smem:[#allocation2]]
      %v1871 = vstv %s1870
      %v1872 = vadd.f32 %v1680, %v1871
      %v1873 = vadd.f32 %v1683, %v1871
      %v1874 = vadd.f32 %v1686, %v1871
      %v1875 = vadd.f32 %v1689, %v1871
      %v1876 = vadd.f32 %v1692, %v1871
      %v1877 = vadd.f32 %v1695, %v1871
      %v1878 = vadd.f32 %v1698, %v1871
      %v1879 = vadd.f32 %v1701, %v1871
      %v1880 = vadd.f32 %v1704, %v1871
      %v1881 = vadd.f32 %v1707, %v1871
      %v1882 = vadd.f32 %v1710, %v1871
      %v1883 = vadd.f32 %v1713, %v1871
      %v1884 = vadd.f32 %v1716, %v1871
      %v1885 = vadd.f32 %v1719, %v1871
      %v1886 = vadd.f32 %v1722, %v1871
      %v1887 = vadd.f32 %v1725, %v1871
      %v1888 = vadd.f32 %v1728, %v1871
      %v1889 = vadd.f32 %v1731, %v1871
      %v1890 = vadd.f32 %v1734, %v1871
      %v1891 = vadd.f32 %v1737, %v1871
      %v1892 = vadd.f32 %v1740, %v1871
      %v1893 = vadd.f32 %v1743, %v1871
      %v1894 = vadd.f32 %v1746, %v1871
      %v1895 = vadd.f32 %v1749, %v1871
      %v1896 = vadd.f32 %v1752, %v1871
      %v1897 = vadd.f32 %v1755, %v1871
      %v1898 = vadd.f32 %v1758, %v1871
      %v1899 = vadd.f32 %v1761, %v1871
      %v1900 = vadd.f32 %v1764, %v1871
      %v1901 = vadd.f32 %v1767, %v1871
      %v1902 = vadd.f32 %v1770, %v1871
      %v1903 = vadd.f32 %v1773, %v1871
      %v1904 = vadd.f32 %v1776, %v1871
      %v1905 = vadd.f32 %v1779, %v1871
      %v1906 = vadd.f32 %v1782, %v1871
      %v1907 = vadd.f32 %v1785, %v1871
      %v1908 = vadd.f32 %v1788, %v1871
      %v1909 = vadd.f32 %v1791, %v1871
      %v1910 = vadd.f32 %v1794, %v1871
      %v1911 = vadd.f32 %v1797, %v1871
      %v1912 = vadd.f32 %v1800, %v1871
      %v1913 = vadd.f32 %v1803, %v1871
      %v1914 = vadd.f32 %v1806, %v1871
      %v1915 = vadd.f32 %v1809, %v1871
      %v1916 = vadd.f32 %v1812, %v1871
      %v1917 = vadd.f32 %v1815, %v1871
      %v1918 = vadd.f32 %v1818, %v1871
      %v1919 = vadd.f32 %v1821, %v1871
      %v1920 = vadd.f32 %v1824, %v1871
      %v1921 = vadd.f32 %v1827, %v1871
      %v1922 = vadd.f32 %v1830, %v1871
      %v1923 = vadd.f32 %v1833, %v1871
      %v1924 = vadd.f32 %v1836, %v1871
      %v1925 = vadd.f32 %v1839, %v1871
      %v1926 = vadd.f32 %v1842, %v1871
      %v1927 = vadd.f32 %v1845, %v1871
      %v1928 = vadd.f32 %v1848, %v1871
      %v1929 = vadd.f32 %v1851, %v1871
      %v1930 = vadd.f32 %v1854, %v1871
      %v1931 = vadd.f32 %v1857, %v1871
      %v1932 = vadd.f32 %v1860, %v1871
      %v1933 = vadd.f32 %v1863, %v1871
      %v1934 = vadd.f32 %v1866, %v1871
      %v1935 = vadd.f32 %v1869, %v1871
      %v1936 = vxor.u32 %v1872, 2147483648
      %v1937 = vxor.u32 %v1873, 2147483648
      %v1938 = vxor.u32 %v1874, 2147483648
      %v1939 = vxor.u32 %v1875, 2147483648
      %v1940 = vxor.u32 %v1876, 2147483648
      %v1941 = vxor.u32 %v1877, 2147483648
      %v1942 = vxor.u32 %v1878, 2147483648
      %v1943 = vxor.u32 %v1879, 2147483648
      %v1944 = vxor.u32 %v1880, 2147483648
      %v1945 = vxor.u32 %v1881, 2147483648
      %v1946 = vxor.u32 %v1882, 2147483648
      %v1947 = vxor.u32 %v1883, 2147483648
      %v1948 = vxor.u32 %v1884, 2147483648
      %v1949 = vxor.u32 %v1885, 2147483648
      %v1950 = vxor.u32 %v1886, 2147483648
      %v1951 = vxor.u32 %v1887, 2147483648
      %v1952 = vxor.u32 %v1888, 2147483648
      %v1953 = vxor.u32 %v1889, 2147483648
      %v1954 = vxor.u32 %v1890, 2147483648
      %v1955 = vxor.u32 %v1891, 2147483648
      %v1956 = vxor.u32 %v1892, 2147483648
      %v1957 = vxor.u32 %v1893, 2147483648
      %v1958 = vxor.u32 %v1894, 2147483648
      %v1959 = vxor.u32 %v1895, 2147483648
      %v1960 = vxor.u32 %v1896, 2147483648
      %v1961 = vxor.u32 %v1897, 2147483648
      %v1962 = vxor.u32 %v1898, 2147483648
      %v1963 = vxor.u32 %v1899, 2147483648
      %v1964 = vxor.u32 %v1900, 2147483648
      %v1965 = vxor.u32 %v1901, 2147483648
      %v1966 = vxor.u32 %v1902, 2147483648
      %v1967 = vxor.u32 %v1903, 2147483648
      %v1968 = vxor.u32 %v1904, 2147483648
      %v1969 = vxor.u32 %v1905, 2147483648
      %v1970 = vxor.u32 %v1906, 2147483648
      %v1971 = vxor.u32 %v1907, 2147483648
      %v1972 = vxor.u32 %v1908, 2147483648
      %v1973 = vxor.u32 %v1909, 2147483648
      %v1974 = vxor.u32 %v1910, 2147483648
      %v1975 = vxor.u32 %v1911, 2147483648
      %v1976 = vxor.u32 %v1912, 2147483648
      %v1977 = vxor.u32 %v1913, 2147483648
      %v1978 = vxor.u32 %v1914, 2147483648
      %v1979 = vxor.u32 %v1915, 2147483648
      %v1980 = vxor.u32 %v1916, 2147483648
      %v1981 = vxor.u32 %v1917, 2147483648
      %v1982 = vxor.u32 %v1918, 2147483648
      %v1983 = vxor.u32 %v1919, 2147483648
      %v1984 = vxor.u32 %v1920, 2147483648
      %v1985 = vxor.u32 %v1921, 2147483648
      %v1986 = vxor.u32 %v1922, 2147483648
      %v1987 = vxor.u32 %v1923, 2147483648
      %v1988 = vxor.u32 %v1924, 2147483648
      %v1989 = vxor.u32 %v1925, 2147483648
      %v1990 = vxor.u32 %v1926, 2147483648
      %v1991 = vxor.u32 %v1927, 2147483648
      %v1992 = vxor.u32 %v1928, 2147483648
      %v1993 = vxor.u32 %v1929, 2147483648
      %v1994 = vxor.u32 %v1930, 2147483648
      %v1995 = vxor.u32 %v1931, 2147483648
      %v1996 = vxor.u32 %v1932, 2147483648
      %v1997 = vxor.u32 %v1933, 2147483648
      %v1998 = vxor.u32 %v1934, 2147483648
      %v1999 = vxor.u32 %v1935, 2147483648
      %v2000 = vmul.f32 %v1936, 1.442695
      %v2001 = vpow.pop %v2000
      %v2002 = vmul.f32 %v1937, 1.442695
      %v2003 = vpow.pop %v2002
      %v2004 = vmul.f32 %v1938, 1.442695
      %v2005 = vpow.pop %v2004
      %v2006 = vmul.f32 %v1939, 1.442695
      %v2007 = vpow.pop %v2006
      %v2008 = vmul.f32 %v1940, 1.442695
      %v2009 = vpow.pop %v2008
      %v2010 = vmul.f32 %v1941, 1.442695
      %v2011 = vpow.pop %v2010
      %v2012 = vmul.f32 %v1942, 1.442695
      %v2013 = vpow.pop %v2012
      %v2014 = vmul.f32 %v1943, 1.442695
      %v2015 = vpow.pop %v2014
      %v2016 = vmul.f32 %v1944, 1.442695
      %v2017 = vpow.pop %v2016
      %v2018 = vmul.f32 %v1945, 1.442695
      %v2019 = vpow.pop %v2018
      %v2020 = vmul.f32 %v1946, 1.442695
      %v2021 = vpow.pop %v2020
      %v2022 = vmul.f32 %v1947, 1.442695
      %v2023 = vpow.pop %v2022
      %v2024 = vmul.f32 %v1948, 1.442695
      %v2025 = vpow.pop %v2024
      %v2026 = vmul.f32 %v1949, 1.442695
      %v2027 = vpow.pop %v2026
      %v2028 = vmul.f32 %v1950, 1.442695
      %v2029 = vpow.pop %v2028
      %v2030 = vmul.f32 %v1951, 1.442695
      %v2031 = vpow.pop %v2030
      %v2032 = vmul.f32 %v1952, 1.442695
      %v2033 = vpow.pop %v2032
      %v2034 = vmul.f32 %v1953, 1.442695
      %v2035 = vpow.pop %v2034
      %v2036 = vmul.f32 %v1954, 1.442695
      %v2037 = vpow.pop %v2036
      %v2038 = vmul.f32 %v1955, 1.442695
      %v2039 = vpow.pop %v2038
      %v2040 = vmul.f32 %v1956, 1.442695
      %v2041 = vpow.pop %v2040
      %v2042 = vmul.f32 %v1957, 1.442695
      %v2043 = vpow.pop %v2042
      %v2044 = vmul.f32 %v1958, 1.442695
      %v2045 = vpow.pop %v2044
      %v2046 = vmul.f32 %v1959, 1.442695
      %v2047 = vpow.pop %v2046
      %v2048 = vmul.f32 %v1960, 1.442695
      %v2049 = vpow.pop %v2048
      %v2050 = vmul.f32 %v1961, 1.442695
      %v2051 = vpow.pop %v2050
      %v2052 = vmul.f32 %v1962, 1.442695
      %v2053 = vpow.pop %v2052
      %v2054 = vmul.f32 %v1963, 1.442695
      %v2055 = vpow.pop %v2054
      %v2056 = vmul.f32 %v1964, 1.442695
      %v2057 = vpow.pop %v2056
      %v2058 = vmul.f32 %v1965, 1.442695
      %v2059 = vpow.pop %v2058
      %v2060 = vmul.f32 %v1966, 1.442695
      %v2061 = vpow.pop %v2060
      %v2062 = vmul.f32 %v1967, 1.442695
      %v2063 = vpow.pop %v2062
      %v2064 = vmul.f32 %v1968, 1.442695
      %v2065 = vpow.pop %v2064
      %v2066 = vmul.f32 %v1969, 1.442695
      %v2067 = vpow.pop %v2066
      %v2068 = vmul.f32 %v1970, 1.442695
      %v2069 = vpow.pop %v2068
      %v2070 = vmul.f32 %v1971, 1.442695
      %v2071 = vpow.pop %v2070
      %v2072 = vmul.f32 %v1972, 1.442695
      %v2073 = vpow.pop %v2072
      %v2074 = vmul.f32 %v1973, 1.442695
      %v2075 = vpow.pop %v2074
      %v2076 = vmul.f32 %v1974, 1.442695
      %v2077 = vpow.pop %v2076
      %v2078 = vmul.f32 %v1975, 1.442695
      %v2079 = vpow.pop %v2078
      %v2080 = vmul.f32 %v1976, 1.442695
      %v2081 = vpow.pop %v2080
      %v2082 = vmul.f32 %v1977, 1.442695
      %v2083 = vpow.pop %v2082
      %v2084 = vmul.f32 %v1978, 1.442695
      %v2085 = vpow.pop %v2084
      %v2086 = vmul.f32 %v1979, 1.442695
      %v2087 = vpow.pop %v2086
      %v2088 = vmul.f32 %v1980, 1.442695
      %v2089 = vpow.pop %v2088
      %v2090 = vmul.f32 %v1981, 1.442695
      %v2091 = vpow.pop %v2090
      %v2092 = vmul.f32 %v1982, 1.442695
      %v2093 = vpow.pop %v2092
      %v2094 = vmul.f32 %v1983, 1.442695
      %v2095 = vpow.pop %v2094
      %v2096 = vmul.f32 %v1984, 1.442695
      %v2097 = vpow.pop %v2096
      %v2098 = vmul.f32 %v1985, 1.442695
      %v2099 = vpow.pop %v2098
      %v2100 = vmul.f32 %v1986, 1.442695
      %v2101 = vpow.pop %v2100
      %v2102 = vmul.f32 %v1987, 1.442695
      %v2103 = vpow.pop %v2102
      %v2104 = vmul.f32 %v1988, 1.442695
      %v2105 = vpow.pop %v2104
      %v2106 = vmul.f32 %v1989, 1.442695
      %v2107 = vpow.pop %v2106
      %v2108 = vmul.f32 %v1990, 1.442695
      %v2109 = vpow.pop %v2108
      %v2110 = vmul.f32 %v1991, 1.442695
      %v2111 = vpow.pop %v2110
      %v2112 = vmul.f32 %v1992, 1.442695
      %v2113 = vpow.pop %v2112
      %v2114 = vmul.f32 %v1993, 1.442695
      %v2115 = vpow.pop %v2114
      %v2116 = vmul.f32 %v1994, 1.442695
      %v2117 = vpow.pop %v2116
      %v2118 = vmul.f32 %v1995, 1.442695
      %v2119 = vpow.pop %v2118
      %v2120 = vmul.f32 %v1996, 1.442695
      %v2121 = vpow.pop %v2120
      %v2122 = vmul.f32 %v1997, 1.442695
      %v2123 = vpow.pop %v2122
      %v2124 = vmul.f32 %v1998, 1.442695
      %v2125 = vpow.pop %v2124
      %v2126 = vmul.f32 %v1999, 1.442695
      %v2127 = vpow.pop %v2126
      %v2128 = vadd.f32 %v2001, 1.0
      %v2129 = vadd.f32 %v2003, 1.0
      %v2130 = vadd.f32 %v2005, 1.0
      %v2131 = vadd.f32 %v2007, 1.0
      %v2132 = vadd.f32 %v2009, 1.0
      %v2133 = vadd.f32 %v2011, 1.0
      %v2134 = vadd.f32 %v2013, 1.0
      %v2135 = vadd.f32 %v2015, 1.0
      %v2136 = vadd.f32 %v2017, 1.0
      %v2137 = vadd.f32 %v2019, 1.0
      %v2138 = vadd.f32 %v2021, 1.0
      %v2139 = vadd.f32 %v2023, 1.0
      %v2140 = vadd.f32 %v2025, 1.0
      %v2141 = vadd.f32 %v2027, 1.0
      %v2142 = vadd.f32 %v2029, 1.0
      %v2143 = vadd.f32 %v2031, 1.0
      %v2144 = vadd.f32 %v2033, 1.0
      %v2145 = vadd.f32 %v2035, 1.0
      %v2146 = vadd.f32 %v2037, 1.0
      %v2147 = vadd.f32 %v2039, 1.0
      %v2148 = vadd.f32 %v2041, 1.0
      %v2149 = vadd.f32 %v2043, 1.0
      %v2150 = vadd.f32 %v2045, 1.0
      %v2151 = vadd.f32 %v2047, 1.0
      %v2152 = vadd.f32 %v2049, 1.0
      %v2153 = vadd.f32 %v2051, 1.0
      %v2154 = vadd.f32 %v2053, 1.0
      %v2155 = vadd.f32 %v2055, 1.0
      %v2156 = vadd.f32 %v2057, 1.0
      %v2157 = vadd.f32 %v2059, 1.0
      %v2158 = vadd.f32 %v2061, 1.0
      %v2159 = vadd.f32 %v2063, 1.0
      %v2160 = vadd.f32 %v2065, 1.0
      %v2161 = vadd.f32 %v2067, 1.0
      %v2162 = vadd.f32 %v2069, 1.0
      %v2163 = vadd.f32 %v2071, 1.0
      %v2164 = vadd.f32 %v2073, 1.0
      %v2165 = vadd.f32 %v2075, 1.0
      %v2166 = vadd.f32 %v2077, 1.0
      %v2167 = vadd.f32 %v2079, 1.0
      %v2168 = vadd.f32 %v2081, 1.0
      %v2169 = vadd.f32 %v2083, 1.0
      %v2170 = vadd.f32 %v2085, 1.0
      %v2171 = vadd.f32 %v2087, 1.0
      %v2172 = vadd.f32 %v2089, 1.0
      %v2173 = vadd.f32 %v2091, 1.0
      %v2174 = vadd.f32 %v2093, 1.0
      %v2175 = vadd.f32 %v2095, 1.0
      %v2176 = vadd.f32 %v2097, 1.0
      %v2177 = vadd.f32 %v2099, 1.0
      %v2178 = vadd.f32 %v2101, 1.0
      %v2179 = vadd.f32 %v2103, 1.0
      %v2180 = vadd.f32 %v2105, 1.0
      %v2181 = vadd.f32 %v2107, 1.0
      %v2182 = vadd.f32 %v2109, 1.0
      %v2183 = vadd.f32 %v2111, 1.0
      %v2184 = vadd.f32 %v2113, 1.0
      %v2185 = vadd.f32 %v2115, 1.0
      %v2186 = vadd.f32 %v2117, 1.0
      %v2187 = vadd.f32 %v2119, 1.0
      %v2188 = vadd.f32 %v2121, 1.0
      %v2189 = vadd.f32 %v2123, 1.0
      %v2190 = vadd.f32 %v2125, 1.0
      %v2191 = vadd.f32 %v2127, 1.0
      %v2192 = vrcp.pop %v2128
      %v2193 = vmul.f32 1.0, %v2192
      %v2194 = vrcp.pop %v2129
      %v2195 = vmul.f32 1.0, %v2194
      %v2196 = vrcp.pop %v2130
      %v2197 = vmul.f32 1.0, %v2196
      %v2198 = vrcp.pop %v2131
      %v2199 = vmul.f32 1.0, %v2198
      %v2200 = vrcp.pop %v2132
      %v2201 = vmul.f32 1.0, %v2200
      %v2202 = vrcp.pop %v2133
      %v2203 = vmul.f32 1.0, %v2202
      %v2204 = vrcp.pop %v2134
      %v2205 = vmul.f32 1.0, %v2204
      %v2206 = vrcp.pop %v2135
      %v2207 = vmul.f32 1.0, %v2206
      %v2208 = vrcp.pop %v2136
      %v2209 = vmul.f32 1.0, %v2208
      %v2210 = vrcp.pop %v2137
      %v2211 = vmul.f32 1.0, %v2210
      %v2212 = vrcp.pop %v2138
      %v2213 = vmul.f32 1.0, %v2212
      %v2214 = vrcp.pop %v2139
      %v2215 = vmul.f32 1.0, %v2214
      %v2216 = vrcp.pop %v2140
      %v2217 = vmul.f32 1.0, %v2216
      %v2218 = vrcp.pop %v2141
      %v2219 = vmul.f32 1.0, %v2218
      %v2220 = vrcp.pop %v2142
      %v2221 = vmul.f32 1.0, %v2220
      %v2222 = vrcp.pop %v2143
      %v2223 = vmul.f32 1.0, %v2222
      %v2224 = vrcp.pop %v2144
      %v2225 = vmul.f32 1.0, %v2224
      %v2226 = vrcp.pop %v2145
      %v2227 = vmul.f32 1.0, %v2226
      %v2228 = vrcp.pop %v2146
      %v2229 = vmul.f32 1.0, %v2228
      %v2230 = vrcp.pop %v2147
      %v2231 = vmul.f32 1.0, %v2230
      %v2232 = vrcp.pop %v2148
      %v2233 = vmul.f32 1.0, %v2232
      %v2234 = vrcp.pop %v2149
      %v2235 = vmul.f32 1.0, %v2234
      %v2236 = vrcp.pop %v2150
      %v2237 = vmul.f32 1.0, %v2236
      %v2238 = vrcp.pop %v2151
      %v2239 = vmul.f32 1.0, %v2238
      %v2240 = vrcp.pop %v2152
      %v2241 = vmul.f32 1.0, %v2240
      %v2242 = vrcp.pop %v2153
      %v2243 = vmul.f32 1.0, %v2242
      %v2244 = vrcp.pop %v2154
      %v2245 = vmul.f32 1.0, %v2244
      %v2246 = vrcp.pop %v2155
      %v2247 = vmul.f32 1.0, %v2246
      %v2248 = vrcp.pop %v2156
      %v2249 = vmul.f32 1.0, %v2248
      %v2250 = vrcp.pop %v2157
      %v2251 = vmul.f32 1.0, %v2250
      %v2252 = vrcp.pop %v2158
      %v2253 = vmul.f32 1.0, %v2252
      %v2254 = vrcp.pop %v2159
      %v2255 = vmul.f32 1.0, %v2254
      %v2256 = vrcp.pop %v2160
      %v2257 = vmul.f32 1.0, %v2256
      %v2258 = vrcp.pop %v2161
      %v2259 = vmul.f32 1.0, %v2258
      %v2260 = vrcp.pop %v2162
      %v2261 = vmul.f32 1.0, %v2260
      %v2262 = vrcp.pop %v2163
      %v2263 = vmul.f32 1.0, %v2262
      %v2264 = vrcp.pop %v2164
      %v2265 = vmul.f32 1.0, %v2264
      %v2266 = vrcp.pop %v2165
      %v2267 = vmul.f32 1.0, %v2266
      %v2268 = vrcp.pop %v2166
      %v2269 = vmul.f32 1.0, %v2268
      %v2270 = vrcp.pop %v2167
      %v2271 = vmul.f32 1.0, %v2270
      %v2272 = vrcp.pop %v2168
      %v2273 = vmul.f32 1.0, %v2272
      %v2274 = vrcp.pop %v2169
      %v2275 = vmul.f32 1.0, %v2274
      %v2276 = vrcp.pop %v2170
      %v2277 = vmul.f32 1.0, %v2276
      %v2278 = vrcp.pop %v2171
      %v2279 = vmul.f32 1.0, %v2278
      %v2280 = vrcp.pop %v2172
      %v2281 = vmul.f32 1.0, %v2280
      %v2282 = vrcp.pop %v2173
      %v2283 = vmul.f32 1.0, %v2282
      %v2284 = vrcp.pop %v2174
      %v2285 = vmul.f32 1.0, %v2284
      %v2286 = vrcp.pop %v2175
      %v2287 = vmul.f32 1.0, %v2286
      %v2288 = vrcp.pop %v2176
      %v2289 = vmul.f32 1.0, %v2288
      %v2290 = vrcp.pop %v2177
      %v2291 = vmul.f32 1.0, %v2290
      %v2292 = vrcp.pop %v2178
      %v2293 = vmul.f32 1.0, %v2292
      %v2294 = vrcp.pop %v2179
      %v2295 = vmul.f32 1.0, %v2294
      %v2296 = vrcp.pop %v2180
      %v2297 = vmul.f32 1.0, %v2296
      %v2298 = vrcp.pop %v2181
      %v2299 = vmul.f32 1.0, %v2298
      %v2300 = vrcp.pop %v2182
      %v2301 = vmul.f32 1.0, %v2300
      %v2302 = vrcp.pop %v2183
      %v2303 = vmul.f32 1.0, %v2302
      %v2304 = vrcp.pop %v2184
      %v2305 = vmul.f32 1.0, %v2304
      %v2306 = vrcp.pop %v2185
      %v2307 = vmul.f32 1.0, %v2306
      %v2308 = vrcp.pop %v2186
      %v2309 = vmul.f32 1.0, %v2308
      %v2310 = vrcp.pop %v2187
      %v2311 = vmul.f32 1.0, %v2310
      %v2312 = vrcp.pop %v2188
      %v2313 = vmul.f32 1.0, %v2312
      %v2314 = vrcp.pop %v2189
      %v2315 = vmul.f32 1.0, %v2314
      %v2316 = vrcp.pop %v2190
      %v2317 = vmul.f32 1.0, %v2316
      %v2318 = vrcp.pop %v2191
      %v2319 = vmul.f32 1.0, %v2318
      %vm2320 = vcmask 7168
      %2321 = vst.msk [vmem:[%s281] sm:$0xff] %vm2320, %v2193
      %2322 = vst.msk [vmem:[%s281 + $0x8] sm:$0xff] %vm2320, %v2195
      %2323 = vst.msk [vmem:[%s281 + $0x10] sm:$0xff] %vm2320, %v2197
      %2324 = vst.msk [vmem:[%s281 + $0x18] sm:$0xff] %vm2320, %v2199
      %2325 = vst.msk [vmem:[%s281 + $0x20] sm:$0xff] %vm2320, %v2201
      %2326 = vst.msk [vmem:[%s281 + $0x28] sm:$0xff] %vm2320, %v2203
      %2327 = vst.msk [vmem:[%s281 + $0x30] sm:$0xff] %vm2320, %v2205
      %2328 = vst.msk [vmem:[%s281 + $0x38] sm:$0xff] %vm2320, %v2207
      %2329 = vst.msk [vmem:[%s281 + $0x40] sm:$0xff] %vm2320, %v2209
      %2330 = vst.msk [vmem:[%s281 + $0x48] sm:$0xff] %vm2320, %v2211
      %2331 = vst.msk [vmem:[%s281 + $0x50] sm:$0xff] %vm2320, %v2213
      %2332 = vst.msk [vmem:[%s281 + $0x58] sm:$0xff] %vm2320, %v2215
      %2333 = vst.msk [vmem:[%s281 + $0x60] sm:$0xff] %vm2320, %v2217
      %2334 = vst.msk [vmem:[%s281 + $0x68] sm:$0xff] %vm2320, %v2219
      %2335 = vst.msk [vmem:[%s281 + $0x70] sm:$0xff] %vm2320, %v2221
      %2336 = vst.msk [vmem:[%s281 + $0x78] sm:$0xff] %vm2320, %v2223
      %2337 = vst.msk [vmem:[%s281 + $0x80] sm:$0xff] %vm2320, %v2225
      %2338 = vst.msk [vmem:[%s281 + $0x88] sm:$0xff] %vm2320, %v2227
      %2339 = vst.msk [vmem:[%s281 + $0x90] sm:$0xff] %vm2320, %v2229
      %2340 = vst.msk [vmem:[%s281 + $0x98] sm:$0xff] %vm2320, %v2231
      %2341 = vst.msk [vmem:[%s281 + $0xa0] sm:$0xff] %vm2320, %v2233
      %2342 = vst.msk [vmem:[%s281 + $0xa8] sm:$0xff] %vm2320, %v2235
      %2343 = vst.msk [vmem:[%s281 + $0xb0] sm:$0xff] %vm2320, %v2237
      %2344 = vst.msk [vmem:[%s281 + $0xb8] sm:$0xff] %vm2320, %v2239
      %2345 = vst.msk [vmem:[%s281 + $0xc0] sm:$0xff] %vm2320, %v2241
      %2346 = vst.msk [vmem:[%s281 + $0xc8] sm:$0xff] %vm2320, %v2243
      %2347 = vst.msk [vmem:[%s281 + $0xd0] sm:$0xff] %vm2320, %v2245
      %2348 = vst.msk [vmem:[%s281 + $0xd8] sm:$0xff] %vm2320, %v2247
      %2349 = vst.msk [vmem:[%s281 + $0xe0] sm:$0xff] %vm2320, %v2249
      %2350 = vst.msk [vmem:[%s281 + $0xe8] sm:$0xff] %vm2320, %v2251
      %2351 = vst.msk [vmem:[%s281 + $0xf0] sm:$0xff] %vm2320, %v2253
      %2352 = vst.msk [vmem:[%s281 + $0xf8] sm:$0xff] %vm2320, %v2255
      %2353 = vst.msk [vmem:[%s281 + $0x100] sm:$0xff] %vm2320, %v2257
      %2354 = vst.msk [vmem:[%s281 + $0x108] sm:$0xff] %vm2320, %v2259
      %2355 = vst.msk [vmem:[%s281 + $0x110] sm:$0xff] %vm2320, %v2261
      %2356 = vst.msk [vmem:[%s281 + $0x118] sm:$0xff] %vm2320, %v2263
      %2357 = vst.msk [vmem:[%s281 + $0x120] sm:$0xff] %vm2320, %v2265
      %2358 = vst.msk [vmem:[%s281 + $0x128] sm:$0xff] %vm2320, %v2267
      %2359 = vst.msk [vmem:[%s281 + $0x130] sm:$0xff] %vm2320, %v2269
      %2360 = vst.msk [vmem:[%s281 + $0x138] sm:$0xff] %vm2320, %v2271
      %2361 = vst.msk [vmem:[%s281 + $0x140] sm:$0xff] %vm2320, %v2273
      %2362 = vst.msk [vmem:[%s281 + $0x148] sm:$0xff] %vm2320, %v2275
      %2363 = vst.msk [vmem:[%s281 + $0x150] sm:$0xff] %vm2320, %v2277
      %2364 = vst.msk [vmem:[%s281 + $0x158] sm:$0xff] %vm2320, %v2279
      %2365 = vst.msk [vmem:[%s281 + $0x160] sm:$0xff] %vm2320, %v2281
      %2366 = vst.msk [vmem:[%s281 + $0x168] sm:$0xff] %vm2320, %v2283
      %2367 = vst.msk [vmem:[%s281 + $0x170] sm:$0xff] %vm2320, %v2285
      %2368 = vst.msk [vmem:[%s281 + $0x178] sm:$0xff] %vm2320, %v2287
      %2369 = vst.msk [vmem:[%s281 + $0x180] sm:$0xff] %vm2320, %v2289
      %2370 = vst.msk [vmem:[%s281 + $0x188] sm:$0xff] %vm2320, %v2291
      %2371 = vst.msk [vmem:[%s281 + $0x190] sm:$0xff] %vm2320, %v2293
      %2372 = vst.msk [vmem:[%s281 + $0x198] sm:$0xff] %vm2320, %v2295
      %2373 = vst.msk [vmem:[%s281 + $0x1a0] sm:$0xff] %vm2320, %v2297
      %2374 = vst.msk [vmem:[%s281 + $0x1a8] sm:$0xff] %vm2320, %v2299
      %2375 = vst.msk [vmem:[%s281 + $0x1b0] sm:$0xff] %vm2320, %v2301
      %2376 = vst.msk [vmem:[%s281 + $0x1b8] sm:$0xff] %vm2320, %v2303
      %2377 = vst.msk [vmem:[%s281 + $0x1c0] sm:$0xff] %vm2320, %v2305
      %2378 = vst.msk [vmem:[%s281 + $0x1c8] sm:$0xff] %vm2320, %v2307
      %2379 = vst.msk [vmem:[%s281 + $0x1d0] sm:$0xff] %vm2320, %v2309
      %2380 = vst.msk [vmem:[%s281 + $0x1d8] sm:$0xff] %vm2320, %v2311
      %2381 = vst.msk [vmem:[%s281 + $0x1e0] sm:$0xff] %vm2320, %v2313
      %2382 = vst.msk [vmem:[%s281 + $0x1e8] sm:$0xff] %vm2320, %v2315
      %2383 = vst.msk [vmem:[%s281 + $0x1f0] sm:$0xff] %vm2320, %v2317
      %2384 = vst.msk [vmem:[%s281 + $0x1f8] sm:$0xff] %vm2320, %v2319
      %s2385 = smul.u32 64, %s19
      %p2386 = scmp.lt.s32.totalorder %s2385, 127
      %s2387 = scalar_select %p2386, %s2385, 127
      %s2388 = smul.addr %s2387, 8
      %s2389 = scalar_lea.vmem %s7, %s2388
      // Predicated region
      $region49: #{decoder_forward.1} parent=47 // pred_check
        %p2390 = pneg %p189
      $region50: #{decoder_forward.1} parent=47 // pred_check_branch
        %2392 = sbr.rel (%p2390) target = $region52
      $region51: #{decoder_forward.1} parent=47 // pred_region
        %s2393 = smul.u32 64, %s19
      $region52: #{decoder_forward.1} parent=47 // pred_fallthru
        _
    $region48: #{decoder_forward.1} parent=5 // pred_fallthru
      _
    %p2394 = scmp.le.s32.totalorder 2, %s14
    // Predicated region
    $region53: #{decoder_forward.1} parent=5 // pred_check
      %p2395 = pneg %p2394
    $region54: #{decoder_forward.1} parent=5 // pred_check_branch
      %2397 = sbr.rel (%p2395) target = $region56
    $region55: #{decoder_forward.1} parent=5 // pred_region
      %s2398 = ssub.s32 %s14, 2
      // Predicated region
      $region57: #{decoder_forward.1} parent=55 // pred_check
        %p2399 = pneg %p195
      $region58: #{decoder_forward.1} parent=55 // pred_check_branch
        %2401 = sbr.rel (%p2399) target = $region60
      $region59: #{decoder_forward.1} parent=55 // pred_region
        %s2402 = smul.u32 64, %s20
        %p2403 = scmp.lt.s32.totalorder %s2402, 127
        %s2404 = scalar_select %p2403, %s2402, 127
        %s2405 = smul.addr %s2404, 8
        %s2406 = scalar_lea.vmem %s7, %s2405
      $region60: #{decoder_forward.1} parent=55 // pred_fallthru
        _
    $region56: #{decoder_forward.1} parent=5 // pred_fallthru
      _
  $region6: #{decoder_forward.1} parent=0 // loop_footer
    %s18 = sadd.s32 1, %s14
  $region7: #{decoder_forward.1} parent=0 // loop_footer_branch
    %13 = sbr.rel target = $region3
  $region8: #{decoder_forward.1} parent=0 // loop_exit
    _

</llo_original>
